<compile_context>
chip_gen: v6e
topology: v6e:2x2x1
jax: 0.10.0
libtpu: 0.0.40
codegen_flags: <defaults>
</compile_context>

<pallas_src>
import functools

import jax
import jax.numpy as jnp
from jax.experimental import pallas as pl
from jax.experimental.pallas import tpu as pltpu

_LANE = 128
_SUBLANE = 8


def _round_up(n, m):
    return ((n + m - 1) // m) * m


def _vmem_limit_bytes():
    """~75% of this generation's physical VMEM, capped at 100 MiB.

    128 MiB parts (v5e/v6e) -> 96 MiB, 64 MiB parts (v7x) -> 48 MiB.
    """
    cap = 64 * 1024 * 1024
    try:
        cap = int(pltpu.get_tpu_info().vmem_capacity_bytes)
    except Exception:  # non-TPU / older runtime: keep the conservative default
        pass
    return min(cap * 3 // 4, 100 * 1024 * 1024)


# ---------------------------------------------------------------------------
# Tile pickers
# ---------------------------------------------------------------------------
def _pick_vpu_tiles(batch, cin, cout, s_pad, in_bytes, vmem_limit):
    """Choose (o_tile, s_tile) for the VPU path.

    Constraints:
      * vreg live set (2 f32 accumulators carried through the channel loop,
        ~2 planes of in-flight k-temporaries, per-channel x rows and the 3
        upcast weight rows) must fit in ~56 of the 64 vregs.
      * the double-buffered x/w/out blocks must fit the VMEM limit.
    Among feasible tiles, prefer the largest o_tile*s_tile product (fewer grid
    steps, wider lane-dense stores).
    """
    o_candidates = [c for c in (128, 64, 32, 24, 16, 8) if cout % c == 0] or [cout]
    s_candidates = [c for c in (1024, 512, 384, 256, 128) if s_pad % c == 0] or [s_pad]

    def live_vregs(o_t, s_t):
        o_sub = -(-o_t // _SUBLANE)
        lanes = s_t // _LANE
        plane = batch * o_sub * lanes              # one (B, o_t, s_t) f32 plane
        return 4 * plane + 2 * batch * lanes + 3 * o_sub * lanes

    def vmem_bytes(o_t, s_t):
        x_blk = 2 * cin * batch * s_t * in_bytes   # xr + xi
        w_blk = 3 * cin * o_t * s_t * in_bytes     # three Karatsuba planes
        o_blk = 2 * batch * o_t * s_t * 4          # f32 real + imag outputs
        return 2 * (x_blk + w_blk + o_blk)         # double-buffered pipeline

    best = None
    for s_t in s_candidates:
        for o_t in o_candidates:
            if live_vregs(o_t, s_t) > 56:
                continue
            if vmem_bytes(o_t, s_t) > int(0.8 * vmem_limit):
                continue
            cand = (o_t * s_t, o_t, s_t)
            if best is None or cand > best:
                best = cand
    if best is None:
        return o_candidates[-1], s_candidates[-1]
    return best[1], best[2]


def _pick_mxu_s_tile(s_pad, batch, cin2, cout2, in_bytes, vmem_limit):
    """Largest S tile whose double-buffered blocks fit comfortably in VMEM.

    Capped at 256: the batched 'sbi,sio->sbo' contraction may unroll per mode
    inside Mosaic, so we bound per-step code size while still amortizing the
    per-grid-step overhead better than the old 128.
    """
    for s_t in (256, 128):
        if s_pad % s_t:
            continue
        x_blk = s_t * batch * cin2 * in_bytes
        w_blk = s_t * cin2 * cout2 * in_bytes
        o_blk = s_t * batch * cout2 * 4
        if 2 * (x_blk + w_blk + o_blk) <= int(0.6 * vmem_limit):
            return s_t
    return _LANE


# ---------------------------------------------------------------------------
# Kernels
# ---------------------------------------------------------------------------
def _spectral_vpu_kernel(xr_ref, xi_ref, w1_ref, w2_ref, w3_ref, or_ref, oi_ref,
                         *, cin, unroll):
    """VPU (elementwise) path.

    Blocks: x (1, Cin, B, S_tile), w* (1, Cin, O_tile, S_tile),
            out (1, B, O_tile, S_tile);  S_tile lane-dense (multiple of 128).
    out[b,o,s] = sum_i x[b,i,s] * w[i,o,s] via the 3-multiply complex product:
      w1 = wr, w2 = wi - wr, w3 = wr + wi
      k1 = (xr+xi)*w1, k2 = xr*w2, k3 = xi*w3 ; re = k1 - k3, im = k1 + k2.
    Inputs may be bf16; they are upcast right after the read (v5e has no bf16
    VALU) and accumulation is f32.
    """
    acc_shape = or_ref.shape[1:]                       # (B, O_tile, S_tile)

    def body(i, carry):
        acc_r, acc_i = carry
        xr = xr_ref[0, i].astype(jnp.float32)          # (B, S_tile)
        xi = xi_ref[0, i].astype(jnp.float32)
        w1 = w1_ref[0, i].astype(jnp.float32)[None]    # (1, O_tile, S_tile)
        w2 = w2_ref[0, i].astype(jnp.float32)[None]
        w3 = w3_ref[0, i].astype(jnp.float32)[None]
        k1 = (xr + xi)[:, None, :] * w1                # (B, O_tile, S_tile)
        k2 = xr[:, None, :] * w2
        k3 = xi[:, None, :] * w3
        return acc_r + (k1 - k3), acc_i + (k1 + k2)

    zeros = jnp.zeros(acc_shape, jnp.float32)
    acc_r, acc_i = jax.lax.fori_loop(0, cin, body, (zeros, zeros), unroll=unroll)
    or_ref[0] = acc_r
    oi_ref[0] = acc_i


def _spectral_mxu_kernel(x_ref, w_ref, o_ref):
    """MXU path with block-complex packing.

    Blocks: x (1, S_tile, B, 2*Cin), w (1, S_tile, 2*Cin, 2*Cout),
            out (1, S_tile, B, 2*Cout)  -- out[..., :Cout] = Re, [..., Cout:] = Im.
    One real matmul per mode; bf16 inputs feed the MXU directly with f32 acc.
    """
    o_ref[0] = jnp.einsum('sbi,sio->sbo', x_ref[0], w_ref[0],
                          preferred_element_type=jnp.float32)


# ---------------------------------------------------------------------------
# pallas_call wrappers
# ---------------------------------------------------------------------------
def _spectral_mul_vpu(xr, xi, w1, w2, w3):
    """x*: (2, Cin, B, S_pad); w*: (2, Cin, Cout, S_pad) -> 2x (2, B, Cout, S_pad) f32."""
    g, cin, batch, s_pad = xr.shape
    cout = w1.shape[2]
    in_bytes = jnp.dtype(xr.dtype).itemsize
    vmem_limit = _vmem_limit_bytes()
    o_tile, s_tile = _pick_vpu_tiles(batch, cin, cout, s_pad, in_bytes, vmem_limit)

    # Cout-tile axis innermost: the x index_map ignores `oi`, so Pallas skips
    # the redundant DMA and xr/xi are fetched from HBM once per (g, S tile).
    x_spec = pl.BlockSpec((1, cin, batch, s_tile), lambda gi, si, oi: (gi, 0, 0, si))
    w_spec = pl.BlockSpec((1, cin, o_tile, s_tile), lambda gi, si, oi: (gi, 0, oi, si))
    o_spec = pl.BlockSpec((1, batch, o_tile, s_tile), lambda gi, si, oi: (gi, 0, oi, si))

    kernel = functools.partial(_spectral_vpu_kernel, cin=cin,
                               unroll=True if cin <= 8 else 8)
    out_sds = jax.ShapeDtypeStruct((g, batch, cout, s_pad), jnp.float32)
    return pl.pallas_call(
        kernel,
        out_shape=(out_sds, out_sds),
        grid=(g, s_pad // s_tile, cout // o_tile),   # g=2 outermost: clean 2-TC split
        in_specs=[x_spec, x_spec, w_spec, w_spec, w_spec],
        out_specs=(o_spec, o_spec),
        compiler_params=pltpu.CompilerParams(
            dimension_semantics=("parallel", "parallel", "parallel"),
            vmem_limit_bytes=vmem_limit),
    )(xr, xi, w1, w2, w3)


def _spectral_mul_mxu(xri, wri):
    """xri: (2, S_pad, B, 2*Cin); wri: (2, S_pad, 2*Cin, 2*Cout)
       -> (2, S_pad, B, 2*Cout) f32 with [Re | Im] packed along the last dim."""
    g, s_pad, batch, cin2 = xri.shape
    cout2 = wri.shape[3]
    in_bytes = jnp.dtype(xri.dtype).itemsize
    vmem_limit = _vmem_limit_bytes()
    s_tile = _pick_mxu_s_tile(s_pad, batch, cin2, cout2, in_bytes, vmem_limit)

    x_spec = pl.BlockSpec((1, s_tile, batch, cin2), lambda gi, si: (gi, si, 0, 0))
    w_spec = pl.BlockSpec((1, s_tile, cin2, cout2), lambda gi, si: (gi, si, 0, 0))
    o_spec = pl.BlockSpec((1, s_tile, batch, cout2), lambda gi, si: (gi, si, 0, 0))

    out_sds = jax.ShapeDtypeStruct((g, s_pad, batch, cout2), jnp.float32)
    return pl.pallas_call(
        _spectral_mxu_kernel,
        out_shape=out_sds,
        grid=(g, s_pad // s_tile),
        in_specs=[x_spec, w_spec],
        out_specs=o_spec,
        compiler_params=pltpu.CompilerParams(
            dimension_semantics=("parallel", "parallel"),
            vmem_limit_bytes=vmem_limit),
    )(xri, wri)


# ---------------------------------------------------------------------------
# Public API
# ---------------------------------------------------------------------------
def default_use_mxu(in_channels, out_channels, batch):
    """MXU only wins when the per-mode (B,2Cin)@(2Cin,2Cout) matmul is big
    enough to feed the 128/256-row systolic array and 2*Cout is lane-dense."""
    return (min(in_channels, out_channels) >= 32
            and batch >= 16
            and (2 * out_channels) % _LANE == 0)


def prepare_spectral_weights(weights1, weights2, *, use_mxu=False,
                             dtype=jnp.bfloat16):
    """One-time weight re-layout (hoisted out of the per-call path).

    weights1/weights2: (Cin, Cout, modes1, modes2) complex64.
    The flattened mode axis S = modes1*modes2 is zero-padded to a multiple of
    128 (zero padding keeps the padded output modes exactly zero).

    VPU layout (use_mxu=False): 3 Karatsuba planes (wr, wi-wr, wr+wi),
      each (2, Cin, Cout, S_pad), dtype `dtype`.
    MXU layout (use_mxu=True): 1 block-complex plane [[wr, wi], [-wi, wr]],
      shape (2, S_pad, 2*Cin, 2*Cout), dtype `dtype`.
    """
    cin, cout, m1, m2 = weights1.shape
    s = m1 * m2
    s_pad = _round_up(s, _LANE)
    wf = jnp.stack([weights1, weights2], axis=0).reshape(2, cin, cout, s)
    wr = jnp.real(wf).astype(jnp.float32)
    wi = jnp.imag(wf).astype(jnp.float32)
    pad = ((0, 0), (0, 0), (0, 0), (0, s_pad - s))
    wr = jnp.pad(wr, pad)
    wi = jnp.pad(wi, pad)
    if use_mxu:
        top = jnp.concatenate([wr, wi], axis=2)      # rows multiplied by xr
        bot = jnp.concatenate([-wi, wr], axis=2)     # rows multiplied by xi
        w = jnp.concatenate([top, bot], axis=1)      # (2, 2Cin, 2Cout, S_pad)
        w = jnp.transpose(w, (0, 3, 1, 2))           # (2, S_pad, 2Cin, 2Cout)
        return (w.astype(dtype),)
    planes = (wr, wi - wr, wr + wi)                  # Karatsuba planes
    return tuple(p.astype(dtype) for p in planes)


@functools.partial(jax.jit, static_argnames=("modes1", "modes2", "use_mxu"))
def spectral_conv2d(x, w_planes, *, modes1, modes2, use_mxu=False):
    """Forward pass matching PyTorch SpectralConv2d.

    x: (B, Cin, H, W) float32.
    w_planes: output of prepare_spectral_weights(..., use_mxu=use_mxu).
    Returns (B, Cout, H, W) float32.
    """
    batch, cin, h, w = x.shape
    s = modes1 * modes2
    s_pad = _round_up(s, _LANE)
    w_r = w // 2 + 1
    w_planes = tuple(w_planes)

    # Layout-tag check: VPU packing has 3 planes, MXU packing has 1.
    if use_mxu:
        assert len(w_planes) == 1, (
            "w_planes layout mismatch: expected MXU packing from "
            "prepare_spectral_weights(..., use_mxu=True)")
        g2, sp2, ci2, co2 = w_planes[0].shape
        assert (g2, sp2, ci2) == (2, s_pad, 2 * cin), w_planes[0].shape
        cout = co2 // 2
    else:
        assert len(w_planes) == 3, (
            "w_planes layout mismatch: expected VPU packing from "
            "prepare_spectral_weights(..., use_mxu=False)")
        g2, ci2, cout, sp2 = w_planes[0].shape
        assert (g2, ci2, sp2) == (2, cin, s_pad), w_planes[0].shape
    in_dtype = w_planes[0].dtype

    # TODO(synk): rfft2/irfft2 have no Pallas TPU primitive; they stay in XLA.
    x_ft = jnp.fft.rfft2(x)                                      # (B, Cin, H, Wr) c64

    # Gather the two retained row blocks (low / high frequency rows), flatten
    # the modes onto one axis and zero-pad it to a lane-dense multiple of 128.
    xf = jnp.stack([x_ft[:, :, :modes1, :modes2],
                    x_ft[:, :, h - modes1:, :modes2]], axis=0)   # (2, B, Cin, m1, m2)
    xf = xf.reshape(2, batch, cin, s)
    pad = ((0, 0), (0, 0), (0, 0), (0, s_pad - s))
    xr = jnp.pad(jnp.real(xf), pad).astype(in_dtype)
    xi = jnp.pad(jnp.imag(xf), pad).astype(in_dtype)

    if use_mxu:
        # TODO(synk): verify (HLO dump) that this pad/concat/transpose glue fuses;
        # if it materializes, emit the mode gather directly in (2,S,B,2Cin) layout.
        xri = jnp.concatenate([xr, xi], axis=2)                  # (2, B, 2Cin, S_pad)
        xri = jnp.transpose(xri, (0, 3, 1, 2))                   # (2, S_pad, B, 2Cin)
        out = _spectral_mul_mxu(xri, w_planes[0])                # (2, S_pad, B, 2Cout)
        out = jnp.transpose(out, (0, 2, 3, 1))                   # (2, B, 2Cout, S_pad)
        out_r = out[:, :, :cout, :s]
        out_i = out[:, :, cout:, :s]
    else:
        xr_k = jnp.transpose(xr, (0, 2, 1, 3))                   # (2, Cin, B, S_pad)
        xi_k = jnp.transpose(xi, (0, 2, 1, 3))
        out_r, out_i = _spectral_mul_vpu(xr_k, xi_k, *w_planes)  # (2, B, Cout, S_pad)
        out_r = out_r[..., :s]
        out_i = out_i[..., :s]

    out_blocks = (out_r + 1j * out_i).astype(jnp.complex64)
    out_blocks = out_blocks.reshape(2, batch, cout, modes1, modes2)

    # Scatter back into the full rFFT spectrum (rest is zero, as in PyTorch).
    # NOTE: if modes1 > H/2 the two row blocks overlap and the second set wins,
    # exactly matching the PyTorch indexing.
    out_ft = jnp.zeros((batch, cout, h, w_r), jnp.complex64)
    out_ft = out_ft.at[:, :, :modes1, :modes2].set(out_blocks[0])
    out_ft = out_ft.at[:, :, h - modes1:, :modes2].set(out_blocks[1])

    return jnp.fft.irfft2(out_ft, s=(h, w)).astype(jnp.float32)


def _reference(x, weights1, weights2, modes1, modes2):
    """Pure-JAX reference, mirrors the PyTorch forward exactly."""
    b, cin, h, w = x.shape
    cout = weights1.shape[1]
    x_ft = jnp.fft.rfft2(x)
    out_ft = jnp.zeros((b, cout, h, w // 2 + 1), jnp.complex64)
    out_ft = out_ft.at[:, :, :modes1, :modes2].set(
        jnp.einsum('bixy,ioxy->boxy', x_ft[:, :, :modes1, :modes2], weights1))
    out_ft = out_ft.at[:, :, h - modes1:, :modes2].set(
        jnp.einsum('bixy,ioxy->boxy', x_ft[:, :, h - modes1:, :modes2], weights2))
    return jnp.fft.irfft2(out_ft, s=(h, w)).astype(jnp.float32)


def _assert_close(out, ref, rel, tag):
    err = float(jnp.max(jnp.abs(out - ref)))
    scale = float(jnp.max(jnp.abs(ref))) + 1e-12
    assert err <= rel * scale, f"{tag}: max|err|={err} vs {rel}*max|ref|={rel*scale}"


if __name__ == "__main__":
    key = jax.random.PRNGKey(0)
    keys = jax.random.split(key, 10)

    # ---- Test 1: small channels, VPU path, f32 planes (tight check) ----
    batch, cin, cout, h, w = 2, 4, 4, 16, 16
    modes1, modes2 = 4, 4
    x = jax.random.normal(keys[0], (batch, cin, h, w), dtype=jnp.float32)
    scale = 1.0 / (cin * cout)
    w_shape = (cin, cout, modes1, modes2)
    weights1 = (scale * (jax.random.uniform(keys[1], w_shape)
                         + 1j * jax.random.uniform(keys[2], w_shape))).astype(jnp.complex64)
    weights2 = (scale * (jax.random.uniform(keys[3], w_shape)
                         + 1j * jax.random.uniform(keys[4], w_shape))).astype(jnp.complex64)
    ref = jax.block_until_ready(_reference(x, weights1, weights2, modes1, modes2))

    planes_f32 = prepare_spectral_weights(weights1, weights2, use_mxu=False,
                                          dtype=jnp.float32)
    out = jax.block_until_ready(
        spectral_conv2d(x, planes_f32, modes1=modes1, modes2=modes2, use_mxu=False))
    assert out.shape == (batch, cout, h, w), out.shape
    assert out.dtype == jnp.float32, out.dtype
    _assert_close(out, ref, 1e-3, "vpu_f32")

    # ---- Test 2: same problem, VPU path with bf16 weight/activation planes ----
    planes_bf16 = prepare_spectral_weights(weights1, weights2, use_mxu=False,
                                           dtype=jnp.bfloat16)
    out_b = jax.block_until_ready(
        spectral_conv2d(x, planes_bf16, modes1=modes1, modes2=modes2, use_mxu=False))
    _assert_close(out_b, ref, 3e-2, "vpu_bf16")

    # ---- Test 3: moderate channels, MXU block-complex path (bf16) ----
    b2, c2, h2, w2, m1, m2 = 4, 32, 32, 32, 8, 8
    x2 = jax.random.normal(keys[5], (b2, c2, h2, w2), dtype=jnp.float32)
    scale2 = 1.0 / (c2 * c2)
    w_shape2 = (c2, c2, m1, m2)
    wa = (scale2 * (jax.random.uniform(keys[6], w_shape2)
                    + 1j * jax.random.uniform(keys[7], w_shape2))).astype(jnp.complex64)
    wb = (scale2 * (jax.random.uniform(keys[8], w_shape2)
                    + 1j * jax.random.uniform(keys[9], w_shape2))).astype(jnp.complex64)
    ref2 = jax.block_until_ready(_reference(x2, wa, wb, m1, m2))
    planes2 = prepare_spectral_weights(wa, wb, use_mxu=True, dtype=jnp.bfloat16)
    out2 = jax.block_until_ready(
        spectral_conv2d(x2, planes2, modes1=m1, modes2=m2, use_mxu=True))
    assert out2.shape == (b2, c2, h2, w2), out2.shape
    _assert_close(out2, ref2, 3e-2, "mxu_bf16")

    print("KERNEL_OK")
</pallas_src>

<mosaic_0001>
module attributes {stable_mosaic.version = 11 : i64} {
  func.func @_spectral_vpu_kernel(%arg0: i32, %arg1: i32, %arg2: i32, %arg3: memref<1x4x2x128xf32, #tpu.memory_space<vmem>>, %arg4: memref<1x4x2x128xf32, #tpu.memory_space<vmem>>, %arg5: memref<1x4x4x128xf32, #tpu.memory_space<vmem>>, %arg6: memref<1x4x4x128xf32, #tpu.memory_space<vmem>>, %arg7: memref<1x4x4x128xf32, #tpu.memory_space<vmem>>, %arg8: memref<1x2x4x128xf32, #tpu.memory_space<vmem>>, %arg9: memref<1x2x4x128xf32, #tpu.memory_space<vmem>>) attributes {dimension_semantics = [#tpu.dimension_semantics<parallel>, #tpu.dimension_semantics<parallel>, #tpu.dimension_semantics<parallel>], iteration_bounds = array<i64: 2, 1, 1>, scalar_prefetch = 0 : i64, scratch_operands = 0 : i64, tpu.core_type = #tpu.core_type<tc>, window_params = [{transform_indices = @transform_0, window_bounds = array<i64: 1, 4, 2, 128>}, {transform_indices = @transform_1, window_bounds = array<i64: 1, 4, 2, 128>}, {transform_indices = @transform_2, window_bounds = array<i64: 1, 4, 4, 128>}, {transform_indices = @transform_3, window_bounds = array<i64: 1, 4, 4, 128>}, {transform_indices = @transform_4, window_bounds = array<i64: 1, 4, 4, 128>}, {transform_indices = @transform_5, window_bounds = array<i64: 1, 2, 4, 128>}, {transform_indices = @transform_6, window_bounds = array<i64: 1, 2, 4, 128>}]} {
    %cst = arith.constant 0.000000e+00 : f32
    %0 = vector.broadcast %cst : f32 to vector<2x4x128xf32>
    %c0_i32 = arith.constant 0 : i32
    %c0 = arith.constant 0 : index
    %1 = arith.index_cast %c0_i32 : i32 to index
    %c0_0 = arith.constant 0 : index
    %c0_1 = arith.constant 0 : index
    %2 = vector.load %arg3[%c0, %1, %c0_0, %c0_1] : memref<1x4x2x128xf32, #tpu.memory_space<vmem>>, vector<1x1x2x128xf32>
    %3 = vector.shape_cast %2 : vector<1x1x2x128xf32> to vector<2x128xf32>
    %c0_2 = arith.constant 0 : index
    %4 = arith.index_cast %c0_i32 : i32 to index
    %c0_3 = arith.constant 0 : index
    %c0_4 = arith.constant 0 : index
    %5 = vector.load %arg4[%c0_2, %4, %c0_3, %c0_4] : memref<1x4x2x128xf32, #tpu.memory_space<vmem>>, vector<1x1x2x128xf32>
    %6 = vector.shape_cast %5 : vector<1x1x2x128xf32> to vector<2x128xf32>
    %c0_5 = arith.constant 0 : index
    %7 = arith.index_cast %c0_i32 : i32 to index
    %c0_6 = arith.constant 0 : index
    %c0_7 = arith.constant 0 : index
    %8 = vector.load %arg5[%c0_5, %7, %c0_6, %c0_7] : memref<1x4x4x128xf32, #tpu.memory_space<vmem>>, vector<1x1x4x128xf32>
    %9 = vector.shape_cast %8 : vector<1x1x4x128xf32> to vector<4x128xf32>
    %10 = vector.shape_cast %9 : vector<4x128xf32> to vector<1x4x128xf32>
    %c0_8 = arith.constant 0 : index
    %11 = arith.index_cast %c0_i32 : i32 to index
    %c0_9 = arith.constant 0 : index
    %c0_10 = arith.constant 0 : index
    %12 = vector.load %arg6[%c0_8, %11, %c0_9, %c0_10] : memref<1x4x4x128xf32, #tpu.memory_space<vmem>>, vector<1x1x4x128xf32>
    %13 = vector.shape_cast %12 : vector<1x1x4x128xf32> to vector<4x128xf32>
    %14 = vector.shape_cast %13 : vector<4x128xf32> to vector<1x4x128xf32>
    %c0_11 = arith.constant 0 : index
    %15 = arith.index_cast %c0_i32 : i32 to index
    %c0_12 = arith.constant 0 : index
    %c0_13 = arith.constant 0 : index
    %16 = vector.load %arg7[%c0_11, %15, %c0_12, %c0_13] : memref<1x4x4x128xf32, #tpu.memory_space<vmem>>, vector<1x1x4x128xf32>
    %17 = vector.shape_cast %16 : vector<1x1x4x128xf32> to vector<4x128xf32>
    %18 = vector.shape_cast %17 : vector<4x128xf32> to vector<1x4x128xf32>
    %19 = arith.addf %3, %6 : vector<2x128xf32>
    %20 = vector.shape_cast %19 : vector<2x128xf32> to vector<2x1x128xf32>
    %21 = vector.broadcast %20 : vector<2x1x128xf32> to vector<2x4x128xf32>
    %22 = vector.broadcast %10 : vector<1x4x128xf32> to vector<2x4x128xf32>
    %23 = arith.mulf %21, %22 : vector<2x4x128xf32>
    %24 = vector.shape_cast %3 : vector<2x128xf32> to vector<2x1x128xf32>
    %25 = vector.broadcast %24 : vector<2x1x128xf32> to vector<2x4x128xf32>
    %26 = vector.broadcast %14 : vector<1x4x128xf32> to vector<2x4x128xf32>
    %27 = arith.mulf %25, %26 : vector<2x4x128xf32>
    %28 = vector.shape_cast %6 : vector<2x128xf32> to vector<2x1x128xf32>
    %29 = vector.broadcast %28 : vector<2x1x128xf32> to vector<2x4x128xf32>
    %30 = vector.broadcast %18 : vector<1x4x128xf32> to vector<2x4x128xf32>
    %31 = arith.mulf %29, %30 : vector<2x4x128xf32>
    %32 = arith.subf %23, %31 : vector<2x4x128xf32>
    %33 = arith.addf %0, %32 : vector<2x4x128xf32>
    %34 = arith.addf %23, %27 : vector<2x4x128xf32>
    %35 = arith.addf %0, %34 : vector<2x4x128xf32>
    %c1_i32 = arith.constant 1 : i32
    %c0_14 = arith.constant 0 : index
    %36 = arith.index_cast %c1_i32 : i32 to index
    %c0_15 = arith.constant 0 : index
    %c0_16 = arith.constant 0 : index
    %37 = vector.load %arg3[%c0_14, %36, %c0_15, %c0_16] : memref<1x4x2x128xf32, #tpu.memory_space<vmem>>, vector<1x1x2x128xf32>
    %38 = vector.shape_cast %37 : vector<1x1x2x128xf32> to vector<2x128xf32>
    %c0_17 = arith.constant 0 : index
    %39 = arith.index_cast %c1_i32 : i32 to index
    %c0_18 = arith.constant 0 : index
    %c0_19 = arith.constant 0 : index
    %40 = vector.load %arg4[%c0_17, %39, %c0_18, %c0_19] : memref<1x4x2x128xf32, #tpu.memory_space<vmem>>, vector<1x1x2x128xf32>
    %41 = vector.shape_cast %40 : vector<1x1x2x128xf32> to vector<2x128xf32>
    %c0_20 = arith.constant 0 : index
    %42 = arith.index_cast %c1_i32 : i32 to index
    %c0_21 = arith.constant 0 : index
    %c0_22 = arith.constant 0 : index
    %43 = vector.load %arg5[%c0_20, %42, %c0_21, %c0_22] : memref<1x4x4x128xf32, #tpu.memory_space<vmem>>, vector<1x1x4x128xf32>
    %44 = vector.shape_cast %43 : vector<1x1x4x128xf32> to vector<4x128xf32>
    %45 = vector.shape_cast %44 : vector<4x128xf32> to vector<1x4x128xf32>
    %c0_23 = arith.constant 0 : index
    %46 = arith.index_cast %c1_i32 : i32 to index
    %c0_24 = arith.constant 0 : index
    %c0_25 = arith.constant 0 : index
    %47 = vector.load %arg6[%c0_23, %46, %c0_24, %c0_25] : memref<1x4x4x128xf32, #tpu.memory_space<vmem>>, vector<1x1x4x128xf32>
    %48 = vector.shape_cast %47 : vector<1x1x4x128xf32> to vector<4x128xf32>
    %49 = vector.shape_cast %48 : vector<4x128xf32> to vector<1x4x128xf32>
    %c0_26 = arith.constant 0 : index
    %50 = arith.index_cast %c1_i32 : i32 to index
    %c0_27 = arith.constant 0 : index
    %c0_28 = arith.constant 0 : index
    %51 = vector.load %arg7[%c0_26, %50, %c0_27, %c0_28] : memref<1x4x4x128xf32, #tpu.memory_space<vmem>>, vector<1x1x4x128xf32>
    %52 = vector.shape_cast %51 : vector<1x1x4x128xf32> to vector<4x128xf32>
    %53 = vector.shape_cast %52 : vector<4x128xf32> to vector<1x4x128xf32>
    %54 = arith.addf %38, %41 : vector<2x128xf32>
    %55 = vector.shape_cast %54 : vector<2x128xf32> to vector<2x1x128xf32>
    %56 = vector.broadcast %55 : vector<2x1x128xf32> to vector<2x4x128xf32>
    %57 = vector.broadcast %45 : vector<1x4x128xf32> to vector<2x4x128xf32>
    %58 = arith.mulf %56, %57 : vector<2x4x128xf32>
    %59 = vector.shape_cast %38 : vector<2x128xf32> to vector<2x1x128xf32>
    %60 = vector.broadcast %59 : vector<2x1x128xf32> to vector<2x4x128xf32>
    %61 = vector.broadcast %49 : vector<1x4x128xf32> to vector<2x4x128xf32>
    %62 = arith.mulf %60, %61 : vector<2x4x128xf32>
    %63 = vector.shape_cast %41 : vector<2x128xf32> to vector<2x1x128xf32>
    %64 = vector.broadcast %63 : vector<2x1x128xf32> to vector<2x4x128xf32>
    %65 = vector.broadcast %53 : vector<1x4x128xf32> to vector<2x4x128xf32>
    %66 = arith.mulf %64, %65 : vector<2x4x128xf32>
    %67 = arith.subf %58, %66 : vector<2x4x128xf32>
    %68 = arith.addf %33, %67 : vector<2x4x128xf32>
    %69 = arith.addf %58, %62 : vector<2x4x128xf32>
    %70 = arith.addf %35, %69 : vector<2x4x128xf32>
    %c2_i32 = arith.constant 2 : i32
    %c0_29 = arith.constant 0 : index
    %71 = arith.index_cast %c2_i32 : i32 to index
    %c0_30 = arith.constant 0 : index
    %c0_31 = arith.constant 0 : index
    %72 = vector.load %arg3[%c0_29, %71, %c0_30, %c0_31] : memref<1x4x2x128xf32, #tpu.memory_space<vmem>>, vector<1x1x2x128xf32>
    %73 = vector.shape_cast %72 : vector<1x1x2x128xf32> to vector<2x128xf32>
    %c0_32 = arith.constant 0 : index
    %74 = arith.index_cast %c2_i32 : i32 to index
    %c0_33 = arith.constant 0 : index
    %c0_34 = arith.constant 0 : index
    %75 = vector.load %arg4[%c0_32, %74, %c0_33, %c0_34] : memref<1x4x2x128xf32, #tpu.memory_space<vmem>>, vector<1x1x2x128xf32>
    %76 = vector.shape_cast %75 : vector<1x1x2x128xf32> to vector<2x128xf32>
    %c0_35 = arith.constant 0 : index
    %77 = arith.index_cast %c2_i32 : i32 to index
    %c0_36 = arith.constant 0 : index
    %c0_37 = arith.constant 0 : index
    %78 = vector.load %arg5[%c0_35, %77, %c0_36, %c0_37] : memref<1x4x4x128xf32, #tpu.memory_space<vmem>>, vector<1x1x4x128xf32>
    %79 = vector.shape_cast %78 : vector<1x1x4x128xf32> to vector<4x128xf32>
    %80 = vector.shape_cast %79 : vector<4x128xf32> to vector<1x4x128xf32>
    %c0_38 = arith.constant 0 : index
    %81 = arith.index_cast %c2_i32 : i32 to index
    %c0_39 = arith.constant 0 : index
    %c0_40 = arith.constant 0 : index
    %82 = vector.load %arg6[%c0_38, %81, %c0_39, %c0_40] : memref<1x4x4x128xf32, #tpu.memory_space<vmem>>, vector<1x1x4x128xf32>
    %83 = vector.shape_cast %82 : vector<1x1x4x128xf32> to vector<4x128xf32>
    %84 = vector.shape_cast %83 : vector<4x128xf32> to vector<1x4x128xf32>
    %c0_41 = arith.constant 0 : index
    %85 = arith.index_cast %c2_i32 : i32 to index
    %c0_42 = arith.constant 0 : index
    %c0_43 = arith.constant 0 : index
    %86 = vector.load %arg7[%c0_41, %85, %c0_42, %c0_43] : memref<1x4x4x128xf32, #tpu.memory_space<vmem>>, vector<1x1x4x128xf32>
    %87 = vector.shape_cast %86 : vector<1x1x4x128xf32> to vector<4x128xf32>
    %88 = vector.shape_cast %87 : vector<4x128xf32> to vector<1x4x128xf32>
    %89 = arith.addf %73, %76 : vector<2x128xf32>
    %90 = vector.shape_cast %89 : vector<2x128xf32> to vector<2x1x128xf32>
    %91 = vector.broadcast %90 : vector<2x1x128xf32> to vector<2x4x128xf32>
    %92 = vector.broadcast %80 : vector<1x4x128xf32> to vector<2x4x128xf32>
    %93 = arith.mulf %91, %92 : vector<2x4x128xf32>
    %94 = vector.shape_cast %73 : vector<2x128xf32> to vector<2x1x128xf32>
    %95 = vector.broadcast %94 : vector<2x1x128xf32> to vector<2x4x128xf32>
    %96 = vector.broadcast %84 : vector<1x4x128xf32> to vector<2x4x128xf32>
    %97 = arith.mulf %95, %96 : vector<2x4x128xf32>
    %98 = vector.shape_cast %76 : vector<2x128xf32> to vector<2x1x128xf32>
    %99 = vector.broadcast %98 : vector<2x1x128xf32> to vector<2x4x128xf32>
    %100 = vector.broadcast %88 : vector<1x4x128xf32> to vector<2x4x128xf32>
    %101 = arith.mulf %99, %100 : vector<2x4x128xf32>
    %102 = arith.subf %93, %101 : vector<2x4x128xf32>
    %103 = arith.addf %68, %102 : vector<2x4x128xf32>
    %104 = arith.addf %93, %97 : vector<2x4x128xf32>
    %105 = arith.addf %70, %104 : vector<2x4x128xf32>
    %c3_i32 = arith.constant 3 : i32
    %c0_44 = arith.constant 0 : index
    %106 = arith.index_cast %c3_i32 : i32 to index
    %c0_45 = arith.constant 0 : index
    %c0_46 = arith.constant 0 : index
    %107 = vector.load %arg3[%c0_44, %106, %c0_45, %c0_46] : memref<1x4x2x128xf32, #tpu.memory_space<vmem>>, vector<1x1x2x128xf32>
    %108 = vector.shape_cast %107 : vector<1x1x2x128xf32> to vector<2x128xf32>
    %c0_47 = arith.constant 0 : index
    %109 = arith.index_cast %c3_i32 : i32 to index
    %c0_48 = arith.constant 0 : index
    %c0_49 = arith.constant 0 : index
    %110 = vector.load %arg4[%c0_47, %109, %c0_48, %c0_49] : memref<1x4x2x128xf32, #tpu.memory_space<vmem>>, vector<1x1x2x128xf32>
    %111 = vector.shape_cast %110 : vector<1x1x2x128xf32> to vector<2x128xf32>
    %c0_50 = arith.constant 0 : index
    %112 = arith.index_cast %c3_i32 : i32 to index
    %c0_51 = arith.constant 0 : index
    %c0_52 = arith.constant 0 : index
    %113 = vector.load %arg5[%c0_50, %112, %c0_51, %c0_52] : memref<1x4x4x128xf32, #tpu.memory_space<vmem>>, vector<1x1x4x128xf32>
    %114 = vector.shape_cast %113 : vector<1x1x4x128xf32> to vector<4x128xf32>
    %115 = vector.shape_cast %114 : vector<4x128xf32> to vector<1x4x128xf32>
    %c0_53 = arith.constant 0 : index
    %116 = arith.index_cast %c3_i32 : i32 to index
    %c0_54 = arith.constant 0 : index
    %c0_55 = arith.constant 0 : index
    %117 = vector.load %arg6[%c0_53, %116, %c0_54, %c0_55] : memref<1x4x4x128xf32, #tpu.memory_space<vmem>>, vector<1x1x4x128xf32>
    %118 = vector.shape_cast %117 : vector<1x1x4x128xf32> to vector<4x128xf32>
    %119 = vector.shape_cast %118 : vector<4x128xf32> to vector<1x4x128xf32>
    %c0_56 = arith.constant 0 : index
    %120 = arith.index_cast %c3_i32 : i32 to index
    %c0_57 = arith.constant 0 : index
    %c0_58 = arith.constant 0 : index
    %121 = vector.load %arg7[%c0_56, %120, %c0_57, %c0_58] : memref<1x4x4x128xf32, #tpu.memory_space<vmem>>, vector<1x1x4x128xf32>
    %122 = vector.shape_cast %121 : vector<1x1x4x128xf32> to vector<4x128xf32>
    %123 = vector.shape_cast %122 : vector<4x128xf32> to vector<1x4x128xf32>
    %124 = arith.addf %108, %111 : vector<2x128xf32>
    %125 = vector.shape_cast %124 : vector<2x128xf32> to vector<2x1x128xf32>
    %126 = vector.broadcast %125 : vector<2x1x128xf32> to vector<2x4x128xf32>
    %127 = vector.broadcast %115 : vector<1x4x128xf32> to vector<2x4x128xf32>
    %128 = arith.mulf %126, %127 : vector<2x4x128xf32>
    %129 = vector.shape_cast %108 : vector<2x128xf32> to vector<2x1x128xf32>
    %130 = vector.broadcast %129 : vector<2x1x128xf32> to vector<2x4x128xf32>
    %131 = vector.broadcast %119 : vector<1x4x128xf32> to vector<2x4x128xf32>
    %132 = arith.mulf %130, %131 : vector<2x4x128xf32>
    %133 = vector.shape_cast %111 : vector<2x128xf32> to vector<2x1x128xf32>
    %134 = vector.broadcast %133 : vector<2x1x128xf32> to vector<2x4x128xf32>
    %135 = vector.broadcast %123 : vector<1x4x128xf32> to vector<2x4x128xf32>
    %136 = arith.mulf %134, %135 : vector<2x4x128xf32>
    %137 = arith.subf %128, %136 : vector<2x4x128xf32>
    %138 = arith.addf %103, %137 : vector<2x4x128xf32>
    %139 = arith.addf %128, %132 : vector<2x4x128xf32>
    %140 = arith.addf %105, %139 : vector<2x4x128xf32>
    %c4_i32 = arith.constant 4 : i32
    %c0_59 = arith.constant 0 : index
    %c0_60 = arith.constant 0 : index
    %c0_61 = arith.constant 0 : index
    %c0_62 = arith.constant 0 : index
    %141 = vector.load %arg8[%c0_59, %c0_60, %c0_61, %c0_62] : memref<1x2x4x128xf32, #tpu.memory_space<vmem>>, vector<1x2x4x128xf32>
    %142 = vector.shape_cast %141 : vector<1x2x4x128xf32> to vector<2x4x128xf32>
    %143 = vector.shape_cast %138 : vector<2x4x128xf32> to vector<1x2x4x128xf32>
    tpu.vector_store %arg8[%c0_59, %c0_60, %c0_61, %c0_62], %143 {strides = array<i32>} : memref<1x2x4x128xf32, #tpu.memory_space<vmem>>, vector<1x2x4x128xf32>,
    %c0_63 = arith.constant 0 : index
    %c0_64 = arith.constant 0 : index
    %c0_65 = arith.constant 0 : index
    %c0_66 = arith.constant 0 : index
    %144 = vector.load %arg9[%c0_63, %c0_64, %c0_65, %c0_66] : memref<1x2x4x128xf32, #tpu.memory_space<vmem>>, vector<1x2x4x128xf32>
    %145 = vector.shape_cast %144 : vector<1x2x4x128xf32> to vector<2x4x128xf32>
    %146 = vector.shape_cast %140 : vector<2x4x128xf32> to vector<1x2x4x128xf32>
    tpu.vector_store %arg9[%c0_63, %c0_64, %c0_65, %c0_66], %146 {strides = array<i32>} : memref<1x2x4x128xf32, #tpu.memory_space<vmem>>, vector<1x2x4x128xf32>,
    return
  }
  func.func @transform_0(%arg0: i32, %arg1: i32, %arg2: i32) -> (i32, i32, i32, i32) {
    %c0_i32 = arith.constant 0 : i32
    %c0_i32_0 = arith.constant 0 : i32
    %c0_i32_1 = arith.constant 0 : i32
    return %arg0, %c0_i32, %c0_i32_0, %arg1 : i32, i32, i32, i32
  }
  func.func @transform_1(%arg0: i32, %arg1: i32, %arg2: i32) -> (i32, i32, i32, i32) {
    %c0_i32 = arith.constant 0 : i32
    %c0_i32_0 = arith.constant 0 : i32
    %c0_i32_1 = arith.constant 0 : i32
    return %arg0, %c0_i32, %c0_i32_0, %arg1 : i32, i32, i32, i32
  }
  func.func @transform_2(%arg0: i32, %arg1: i32, %arg2: i32) -> (i32, i32, i32, i32) {
    %c0_i32 = arith.constant 0 : i32
    %c0_i32_0 = arith.constant 0 : i32
    return %arg0, %c0_i32, %arg2, %arg1 : i32, i32, i32, i32
  }
  func.func @transform_3(%arg0: i32, %arg1: i32, %arg2: i32) -> (i32, i32, i32, i32) {
    %c0_i32 = arith.constant 0 : i32
    %c0_i32_0 = arith.constant 0 : i32
    return %arg0, %c0_i32, %arg2, %arg1 : i32, i32, i32, i32
  }
  func.func @transform_4(%arg0: i32, %arg1: i32, %arg2: i32) -> (i32, i32, i32, i32) {
    %c0_i32 = arith.constant 0 : i32
    %c0_i32_0 = arith.constant 0 : i32
    return %arg0, %c0_i32, %arg2, %arg1 : i32, i32, i32, i32
  }
  func.func @transform_5(%arg0: i32, %arg1: i32, %arg2: i32) -> (i32, i32, i32, i32) {
    %c0_i32 = arith.constant 0 : i32
    %c0_i32_0 = arith.constant 0 : i32
    return %arg0, %c0_i32, %arg2, %arg1 : i32, i32, i32, i32
  }
  func.func @transform_6(%arg0: i32, %arg1: i32, %arg2: i32) -> (i32, i32, i32, i32) {
    %c0_i32 = arith.constant 0 : i32
    %c0_i32_0 = arith.constant 0 : i32
    return %arg0, %c0_i32, %arg2, %arg1 : i32, i32, i32, i32
  }
}

</mosaic_0001>

<llo_original>
// kernel: spectral_conv2d.1
$region0: #{spectral_conv2d.1}
  #allocation0 [shape = 'u32[]', space=smem, size = 0x4, offset = 0x4, fixed_abs, tag = 'smem constant byte address 0x4 - core index']
  #allocation1 [shape = 'u32[144,128]{1,0:T(1,128)}', space=vmem, size = 0x12000, scoped, tag = 'internal scratch']
  %s0 = inlined_call_operand.vmem [shape: f32[2,4,2,128], index: 0, kind: input, shape index: {}]
  %s1 = inlined_call_operand.vmem [shape: f32[2,4,2,128], index: 1, kind: input, shape index: {}]
  %s2 = inlined_call_operand.vmem [shape: f32[2,4,4,128], index: 2, kind: input, shape index: {}]
  %s3 = inlined_call_operand.vmem [shape: f32[2,4,4,128], index: 3, kind: input, shape index: {}]
  %s4 = inlined_call_operand.vmem [shape: f32[2,4,4,128], index: 4, kind: input, shape index: {}]
  %s5 = inlined_call_operand.vmem [shape: f32[2,2,4,128], index: 5, kind: output, shape index: {0}]
  %s6 = inlined_call_operand.vmem [shape: f32[2,2,4,128], index: 6, kind: output, shape index: {1}]
  %7 = xla_tuple %s5, %s6
  %s8 = sld [smem:[#allocation0]]
  $region61: #{spectral_conv2d.1} parent=0
    _
  %s10 = ssub.s32 1, %s8
  %s11 = scalar_select 0, %s10, %s8
  loop: start=0, step=1, limit=4
  $region2: #{spectral_conv2d.1} parent=0 // loop_pre_header
    _
  $region3: #{spectral_conv2d.1} parent=0 // loop_header
    %s13 = sphi 0, %s17
    %p14 = scmp.ge.s32.totalorder %s13, 4
    %s20 = sphi 0, %s39
    %s21 = sphi 0, %s35
    %s22 = sphi 0, %s31
    %s23 = sphi 0, %s20
    %s24 = sphi 0, %s21
    %s25 = sphi 0, %s22
    %s26 = sphi 0, %s23
    %s27 = sphi 0, %s24
    %s28 = sphi 0, %s25
    %s44 = sphi 0, %s46
    %s47 = sphi 0, %s44
    %s48 = sphi 0, %s47
    %s64 = sphi 0, %s48
    %s72 = sphi 0, %s74
    %s75 = sphi 0, %s72
    %s76 = sphi 0, %s75
    %s92 = sphi 0, %s76
    %s102 = sphi 0, %s104
    %s105 = sphi 0, %s102
    %s106 = sphi 0, %s105
    %s122 = sphi 0, %s106
    %s132 = sphi 0, %s134
    %s135 = sphi 0, %s132
    %s136 = sphi 0, %s135
    %s152 = sphi 0, %s136
    %s162 = sphi 0, %s164
    %s165 = sphi 0, %s162
    %s166 = sphi 0, %s165
    %s182 = sphi 0, %s166
    %s192 = sphi 0, %s194
    %s195 = sphi 0, %s192
    %s196 = sphi 0, %s195
    %s212 = sphi 0, %s196
    %s222 = sphi 0, %s224
    %s225 = sphi 0, %s222
    %s226 = sphi 0, %s225
    %s242 = sphi 0, %s226
  $region4: #{spectral_conv2d.1} parent=0 // loop_header_branch
    %16 = sbr.rel (%p14) target = $region8
  $region5: #{spectral_conv2d.1} parent=0 // loop_body
    %s18 = ssub.s32 %s13, 1
    %s19 = ssub.s32 %s13, 2
    %s29 = sadd.s32 1, %s22
    %p30 = scmp.ge.s32.totalorder %s29, 1
    %s31 = scalar_select %p30, 0, %s29
    %s32 = sadd.s32 1, %s21
    %s33 = scalar_select %p30, %s32, %s21
    %p34 = scmp.ge.s32.totalorder %s33, 1
    %s35 = scalar_select %p34, 0, %s33
    %s36 = sadd.s32 1, %s20
    %s37 = scalar_select %p34, %s36, %s20
    %p38 = scmp.ge.s32.totalorder %s37, 2
    %s39 = scalar_select %p38, 0, %s37
    %s40 = ssub.s32 %s20, %s39
    %s41 = ssub.s32 %s21, %s35
    %s42 = sor.u32 %s40, %s41
    %p43 = scmp.eq.s32.totalorder %s42, 0
    %s45 = sadd.s32 %s44, 1
    %s46 = scalar_select %p43, %s44, %s45
    %p49 = pneg %p43
    %p50 = scmp.eq.s32.totalorder %s13, 1
    %p51 = por %p49, %p50
    %p52 = scmp.ne.s32.totalorder %s44, %s47
    %p53 = scmp.eq.s32.totalorder %s13, 0
    %p54 = por %p52, %p53
    %p55 = scmp.ne.s32.totalorder %s44, %s47
    %p56 = scmp.eq.s32.totalorder %s18, 1
    %p57 = por %p55, %p56
    %p58 = scmp.ne.s32.totalorder %s47, %s48
    %p59 = scmp.eq.s32.totalorder %s18, 0
    %p60 = por %p58, %p59
    %p61 = scmp.ne.s32.totalorder %s47, %s48
    %p62 = scmp.eq.s32.totalorder %s19, 1
    %p63 = por %p61, %p62
    %p65 = scmp.ne.s32.totalorder %s48, %s64
    %p66 = scmp.eq.s32.totalorder %s19, 0
    %p67 = por %p65, %p66
    %s68 = ssub.s32 %s20, %s39
    %s69 = ssub.s32 %s21, %s35
    %s70 = sor.u32 %s68, %s69
    %p71 = scmp.eq.s32.totalorder %s70, 0
    %s73 = sadd.s32 %s72, 1
    %s74 = scalar_select %p71, %s72, %s73
    %p77 = pneg %p71
    %p78 = scmp.eq.s32.totalorder %s13, 1
    %p79 = por %p77, %p78
    %p80 = scmp.ne.s32.totalorder %s72, %s75
    %p81 = scmp.eq.s32.totalorder %s13, 0
    %p82 = por %p80, %p81
    %p83 = scmp.ne.s32.totalorder %s72, %s75
    %p84 = scmp.eq.s32.totalorder %s18, 1
    %p85 = por %p83, %p84
    %p86 = scmp.ne.s32.totalorder %s75, %s76
    %p87 = scmp.eq.s32.totalorder %s18, 0
    %p88 = por %p86, %p87
    %p89 = scmp.ne.s32.totalorder %s75, %s76
    %p90 = scmp.eq.s32.totalorder %s19, 1
    %p91 = por %p89, %p90
    %p93 = scmp.ne.s32.totalorder %s76, %s92
    %p94 = scmp.eq.s32.totalorder %s19, 0
    %p95 = por %p93, %p94
    %s96 = ssub.s32 %s20, %s39
    %s97 = ssub.s32 %s22, %s31
    %s98 = sor.u32 %s96, %s97
    %s99 = ssub.s32 %s21, %s35
    %s100 = sor.u32 %s98, %s99
    %p101 = scmp.eq.s32.totalorder %s100, 0
    %s103 = sadd.s32 %s102, 1
    %s104 = scalar_select %p101, %s102, %s103
    %p107 = pneg %p101
    %p108 = scmp.eq.s32.totalorder %s13, 1
    %p109 = por %p107, %p108
    %p110 = scmp.ne.s32.totalorder %s102, %s105
    %p111 = scmp.eq.s32.totalorder %s13, 0
    %p112 = por %p110, %p111
    %p113 = scmp.ne.s32.totalorder %s102, %s105
    %p114 = scmp.eq.s32.totalorder %s18, 1
    %p115 = por %p113, %p114
    %p116 = scmp.ne.s32.totalorder %s105, %s106
    %p117 = scmp.eq.s32.totalorder %s18, 0
    %p118 = por %p116, %p117
    %p119 = scmp.ne.s32.totalorder %s105, %s106
    %p120 = scmp.eq.s32.totalorder %s19, 1
    %p121 = por %p119, %p120
    %p123 = scmp.ne.s32.totalorder %s106, %s122
    %p124 = scmp.eq.s32.totalorder %s19, 0
    %p125 = por %p123, %p124
    %s126 = ssub.s32 %s20, %s39
    %s127 = ssub.s32 %s22, %s31
    %s128 = sor.u32 %s126, %s127
    %s129 = ssub.s32 %s21, %s35
    %s130 = sor.u32 %s128, %s129
    %p131 = scmp.eq.s32.totalorder %s130, 0
    %s133 = sadd.s32 %s132, 1
    %s134 = scalar_select %p131, %s132, %s133
    %p137 = pneg %p131
    %p138 = scmp.eq.s32.totalorder %s13, 1
    %p139 = por %p137, %p138
    %p140 = scmp.ne.s32.totalorder %s132, %s135
    %p141 = scmp.eq.s32.totalorder %s13, 0
    %p142 = por %p140, %p141
    %p143 = scmp.ne.s32.totalorder %s132, %s135
    %p144 = scmp.eq.s32.totalorder %s18, 1
    %p145 = por %p143, %p144
    %p146 = scmp.ne.s32.totalorder %s135, %s136
    %p147 = scmp.eq.s32.totalorder %s18, 0
    %p148 = por %p146, %p147
    %p149 = scmp.ne.s32.totalorder %s135, %s136
    %p150 = scmp.eq.s32.totalorder %s19, 1
    %p151 = por %p149, %p150
    %p153 = scmp.ne.s32.totalorder %s136, %s152
    %p154 = scmp.eq.s32.totalorder %s19, 0
    %p155 = por %p153, %p154
    %s156 = ssub.s32 %s20, %s39
    %s157 = ssub.s32 %s22, %s31
    %s158 = sor.u32 %s156, %s157
    %s159 = ssub.s32 %s21, %s35
    %s160 = sor.u32 %s158, %s159
    %p161 = scmp.eq.s32.totalorder %s160, 0
    %s163 = sadd.s32 %s162, 1
    %s164 = scalar_select %p161, %s162, %s163
    %p167 = pneg %p161
    %p168 = scmp.eq.s32.totalorder %s13, 1
    %p169 = por %p167, %p168
    %p170 = scmp.ne.s32.totalorder %s162, %s165
    %p171 = scmp.eq.s32.totalorder %s13, 0
    %p172 = por %p170, %p171
    %p173 = scmp.ne.s32.totalorder %s162, %s165
    %p174 = scmp.eq.s32.totalorder %s18, 1
    %p175 = por %p173, %p174
    %p176 = scmp.ne.s32.totalorder %s165, %s166
    %p177 = scmp.eq.s32.totalorder %s18, 0
    %p178 = por %p176, %p177
    %p179 = scmp.ne.s32.totalorder %s165, %s166
    %p180 = scmp.eq.s32.totalorder %s19, 1
    %p181 = por %p179, %p180
    %p183 = scmp.ne.s32.totalorder %s166, %s182
    %p184 = scmp.eq.s32.totalorder %s19, 0
    %p185 = por %p183, %p184
    %s186 = ssub.s32 %s20, %s39
    %s187 = ssub.s32 %s22, %s31
    %s188 = sor.u32 %s186, %s187
    %s189 = ssub.s32 %s21, %s35
    %s190 = sor.u32 %s188, %s189
    %p191 = scmp.eq.s32.totalorder %s190, 0
    %s193 = sadd.s32 %s192, 1
    %s194 = scalar_select %p191, %s192, %s193
    %p197 = pneg %p191
    %p198 = scmp.eq.s32.totalorder %s13, 1
    %p199 = por %p197, %p198
    %p200 = scmp.ne.s32.totalorder %s192, %s195
    %p201 = scmp.eq.s32.totalorder %s13, 0
    %p202 = por %p200, %p201
    %p203 = scmp.ne.s32.totalorder %s192, %s195
    %p204 = scmp.eq.s32.totalorder %s18, 1
    %p205 = por %p203, %p204
    %p206 = scmp.ne.s32.totalorder %s195, %s196
    %p207 = scmp.eq.s32.totalorder %s18, 0
    %p208 = por %p206, %p207
    %p209 = scmp.ne.s32.totalorder %s195, %s196
    %p210 = scmp.eq.s32.totalorder %s19, 1
    %p211 = por %p209, %p210
    %p213 = scmp.ne.s32.totalorder %s196, %s212
    %p214 = scmp.eq.s32.totalorder %s19, 0
    %p215 = por %p213, %p214
    %s216 = ssub.s32 %s20, %s39
    %s217 = ssub.s32 %s22, %s31
    %s218 = sor.u32 %s216, %s217
    %s219 = ssub.s32 %s21, %s35
    %s220 = sor.u32 %s218, %s219
    %p221 = scmp.eq.s32.totalorder %s220, 0
    %s223 = sadd.s32 %s222, 1
    %s224 = scalar_select %p221, %s222, %s223
    %p227 = pneg %p221
    %p228 = scmp.eq.s32.totalorder %s13, 1
    %p229 = por %p227, %p228
    %p230 = scmp.ne.s32.totalorder %s222, %s225
    %p231 = scmp.eq.s32.totalorder %s13, 0
    %p232 = por %p230, %p231
    %p233 = scmp.ne.s32.totalorder %s222, %s225
    %p234 = scmp.eq.s32.totalorder %s18, 1
    %p235 = por %p233, %p234
    %p236 = scmp.ne.s32.totalorder %s225, %s226
    %p237 = scmp.eq.s32.totalorder %s18, 0
    %p238 = por %p236, %p237
    %p239 = scmp.ne.s32.totalorder %s225, %s226
    %p240 = scmp.eq.s32.totalorder %s19, 1
    %p241 = por %p239, %p240
    %p243 = scmp.ne.s32.totalorder %s226, %s242
    %p244 = scmp.eq.s32.totalorder %s19, 0
    %p245 = por %p243, %p244
    %p246 = scmp.le.s32.totalorder 1, %s13
    %p247 = scmp.lt.s32.totalorder %s13, 3
    %p248 = pnand %p246, %p247
    %p249 = pneg %p248
    // Predicated region
    $region9: #{spectral_conv2d.1} parent=5 // pred_check
      _
    $region10: #{spectral_conv2d.1} parent=5 // pred_check_branch
      %251 = sbr.rel (%p248) target = $region12
    $region11: #{spectral_conv2d.1} parent=5 // pred_region
      %s252 = ssub.s32 %s13, 1
    $region12: #{spectral_conv2d.1} parent=5 // pred_fallthru
      _
    %p253 = scmp.lt.s32.totalorder %s13, 2
    // Predicated region
    $region13: #{spectral_conv2d.1} parent=5 // pred_check
      %p254 = pneg %p253
    $region14: #{spectral_conv2d.1} parent=5 // pred_check_branch
      %256 = sbr.rel (%p254) target = $region16
    $region15: #{spectral_conv2d.1} parent=5 // pred_region
      // Predicated region
      $region17: #{spectral_conv2d.1} parent=15 // pred_check
        %p257 = pneg %p54
      $region18: #{spectral_conv2d.1} parent=15 // pred_check_branch
        %259 = sbr.rel (%p257) target = $region20
      $region19: #{spectral_conv2d.1} parent=15 // pred_region
        %p260 = scmp.lt.s32.totalorder %s20, 1
        %s261 = scalar_select %p260, %s20, 1
        %p262 = scmp.lt.s32.totalorder %s21, 0
        %s263 = scalar_select %p262, %s21, 0
        %s264 = smul.addr %s261, 4
        %s265 = sadd.s32 %s263, %s264
        %s266 = smul.addr %s265, 2
        %s267 = scalar_lea.vmem %s0, %s266
      $region20: #{spectral_conv2d.1} parent=15 // pred_fallthru
        _
      // Predicated region
      $region21: #{spectral_conv2d.1} parent=15 // pred_check
        %p268 = pneg %p82
      $region22: #{spectral_conv2d.1} parent=15 // pred_check_branch
        %270 = sbr.rel (%p268) target = $region24
      $region23: #{spectral_conv2d.1} parent=15 // pred_region
        %p271 = scmp.lt.s32.totalorder %s20, 1
        %s272 = scalar_select %p271, %s20, 1
        %p273 = scmp.lt.s32.totalorder %s21, 0
        %s274 = scalar_select %p273, %s21, 0
        %s275 = smul.addr %s272, 4
        %s276 = sadd.s32 %s274, %s275
        %s277 = smul.addr %s276, 2
        %s278 = scalar_lea.vmem %s1, %s277
      $region24: #{spectral_conv2d.1} parent=15 // pred_fallthru
        _
      // Predicated region
      $region25: #{spectral_conv2d.1} parent=15 // pred_check
        %p279 = pneg %p112
      $region26: #{spectral_conv2d.1} parent=15 // pred_check_branch
        %281 = sbr.rel (%p279) target = $region28
      $region27: #{spectral_conv2d.1} parent=15 // pred_region
        %p282 = scmp.lt.s32.totalorder %s20, 1
        %s283 = scalar_select %p282, %s20, 1
        %p284 = scmp.lt.s32.totalorder %s22, 0
        %s285 = scalar_select %p284, %s22, 0
        %p286 = scmp.lt.s32.totalorder %s21, 0
        %s287 = scalar_select %p286, %s21, 0
        %s288 = sadd.s32 %s287, %s285
        %s289 = smul.addr %s283, 4
        %s290 = sadd.s32 %s288, %s289
        %s291 = smul.addr %s290, 4
        %s292 = scalar_lea.vmem %s2, %s291
      $region28: #{spectral_conv2d.1} parent=15 // pred_fallthru
        _
      // Predicated region
      $region29: #{spectral_conv2d.1} parent=15 // pred_check
        %p293 = pneg %p142
      $region30: #{spectral_conv2d.1} parent=15 // pred_check_branch
        %295 = sbr.rel (%p293) target = $region32
      $region31: #{spectral_conv2d.1} parent=15 // pred_region
        %p296 = scmp.lt.s32.totalorder %s20, 1
        %s297 = scalar_select %p296, %s20, 1
        %p298 = scmp.lt.s32.totalorder %s22, 0
        %s299 = scalar_select %p298, %s22, 0
        %p300 = scmp.lt.s32.totalorder %s21, 0
        %s301 = scalar_select %p300, %s21, 0
        %s302 = sadd.s32 %s301, %s299
        %s303 = smul.addr %s297, 4
        %s304 = sadd.s32 %s302, %s303
        %s305 = smul.addr %s304, 4
        %s306 = scalar_lea.vmem %s3, %s305
      $region32: #{spectral_conv2d.1} parent=15 // pred_fallthru
        _
      // Predicated region
      $region33: #{spectral_conv2d.1} parent=15 // pred_check
        %p307 = pneg %p172
      $region34: #{spectral_conv2d.1} parent=15 // pred_check_branch
        %309 = sbr.rel (%p307) target = $region36
      $region35: #{spectral_conv2d.1} parent=15 // pred_region
        %p310 = scmp.lt.s32.totalorder %s20, 1
        %s311 = scalar_select %p310, %s20, 1
        %p312 = scmp.lt.s32.totalorder %s22, 0
        %s313 = scalar_select %p312, %s22, 0
        %p314 = scmp.lt.s32.totalorder %s21, 0
        %s315 = scalar_select %p314, %s21, 0
        %s316 = sadd.s32 %s315, %s313
        %s317 = smul.addr %s311, 4
        %s318 = sadd.s32 %s316, %s317
        %s319 = smul.addr %s318, 4
        %s320 = scalar_lea.vmem %s4, %s319
      $region36: #{spectral_conv2d.1} parent=15 // pred_fallthru
        _
    $region16: #{spectral_conv2d.1} parent=5 // pred_fallthru
      _
    %p321 = scmp.le.s32.totalorder 1, %s13
    %p322 = scmp.lt.s32.totalorder %s13, 3
    %p323 = pnand %p321, %p322
    %p324 = pneg %p323
    // Predicated region
    $region37: #{spectral_conv2d.1} parent=5 // pred_check
      _
    $region38: #{spectral_conv2d.1} parent=5 // pred_check_branch
      %326 = sbr.rel (%p323) target = $region40
    $region39: #{spectral_conv2d.1} parent=5 // pred_region
      %s327 = ssub.s32 %s13, 1
      %p328 = scmp.lt.s32.totalorder %s23, 1
      %s329 = scalar_select %p328, %s23, 1
      %p330 = scmp.lt.s32.totalorder %s24, 0
      %s331 = scalar_select %p330, %s24, 0
      %s332 = smul.addr %s329, 4
      %s333 = sadd.s32 %s331, %s332
      %s334 = smul.addr %s333, 2
      %s335 = scalar_lea.vmem %s0, %s334
      %p336 = pneg %p60
      %p337 = pneg %p57
      %p338 = scmp.lt.s32.totalorder %s23, 1
      %s339 = scalar_select %p338, %s23, 1
      %p340 = scmp.lt.s32.totalorder %s24, 0
      %s341 = scalar_select %p340, %s24, 0
      %s342 = smul.addr %s339, 4
      %s343 = sadd.s32 %s341, %s342
      %s344 = smul.addr %s343, 2
      %s345 = scalar_lea.vmem %s1, %s344
      %p346 = pneg %p88
      %p347 = pneg %p85
      %p348 = scmp.lt.s32.totalorder %s23, 1
      %s349 = scalar_select %p348, %s23, 1
      %p350 = scmp.lt.s32.totalorder %s25, 0
      %s351 = scalar_select %p350, %s25, 0
      %p352 = scmp.lt.s32.totalorder %s24, 0
      %s353 = scalar_select %p352, %s24, 0
      %s354 = sadd.s32 %s353, %s351
      %s355 = smul.addr %s349, 4
      %s356 = sadd.s32 %s354, %s355
      %s357 = smul.addr %s356, 4
      %s358 = scalar_lea.vmem %s2, %s357
      %p359 = pneg %p118
      %p360 = pneg %p115
      %p361 = scmp.lt.s32.totalorder %s23, 1
      %s362 = scalar_select %p361, %s23, 1
      %p363 = scmp.lt.s32.totalorder %s25, 0
      %s364 = scalar_select %p363, %s25, 0
      %p365 = scmp.lt.s32.totalorder %s24, 0
      %s366 = scalar_select %p365, %s24, 0
      %s367 = sadd.s32 %s366, %s364
      %s368 = smul.addr %s362, 4
      %s369 = sadd.s32 %s367, %s368
      %s370 = smul.addr %s369, 4
      %s371 = scalar_lea.vmem %s3, %s370
      %p372 = pneg %p148
      %p373 = pneg %p145
      %p374 = scmp.lt.s32.totalorder %s23, 1
      %s375 = scalar_select %p374, %s23, 1
      %p376 = scmp.lt.s32.totalorder %s25, 0
      %s377 = scalar_select %p376, %s25, 0
      %p378 = scmp.lt.s32.totalorder %s24, 0
      %s379 = scalar_select %p378, %s24, 0
      %s380 = sadd.s32 %s379, %s377
      %s381 = smul.addr %s375, 4
      %s382 = sadd.s32 %s380, %s381
      %s383 = smul.addr %s382, 4
      %s384 = scalar_lea.vmem %s4, %s383
      %p385 = pneg %p178
      %p386 = pneg %p175
      %p387 = pneg %p208
      %p388 = pneg %p205
      %p389 = scmp.lt.s32.totalorder %s23, 1
      %s390 = scalar_select %p389, %s23, 1
      %p391 = scmp.lt.s32.totalorder %s25, 0
      %s392 = scalar_select %p391, %s25, 0
      %p393 = scmp.lt.s32.totalorder %s24, 0
      %s394 = scalar_select %p393, %s24, 0
      %s395 = sadd.s32 %s394, %s392
      %s396 = smul.addr %s390, 2
      %s397 = sadd.s32 %s395, %s396
      %s398 = smul.addr %s397, 4
      %s399 = scalar_lea.vmem %s5, %s398
      %p400 = pneg %p238
      %p401 = pneg %p235
      %p402 = scmp.lt.s32.totalorder %s23, 1
      %s403 = scalar_select %p402, %s23, 1
      %p404 = scmp.lt.s32.totalorder %s25, 0
      %s405 = scalar_select %p404, %s25, 0
      %p406 = scmp.lt.s32.totalorder %s24, 0
      %s407 = scalar_select %p406, %s24, 0
      %s408 = sadd.s32 %s407, %s405
      %s409 = smul.addr %s403, 2
      %s410 = sadd.s32 %s408, %s409
      %s411 = smul.addr %s410, 4
      %s412 = scalar_lea.vmem %s6, %s411
      %p413 = scmp.lt.s32.totalorder %s23, 1
      %s414 = scalar_select %p413, %s23, 1
      %p415 = scmp.lt.s32.totalorder %s24, 0
      %s416 = scalar_select %p415, %s24, 0
      %s417 = smul.addr %s414, 4
      %s418 = sadd.s32 %s416, %s417
      %s419 = smul.addr %s418, 2
      %s420 = scalar_lea.vmem %s0, %s419
      %p421 = scmp.lt.s32.totalorder %s23, 1
      %s422 = scalar_select %p421, %s23, 1
      %p423 = scmp.lt.s32.totalorder %s24, 0
      %s424 = scalar_select %p423, %s24, 0
      %s425 = smul.addr %s422, 4
      %s426 = sadd.s32 %s424, %s425
      %s427 = smul.addr %s426, 2
      %s428 = scalar_lea.vmem %s1, %s427
      %p429 = scmp.lt.s32.totalorder %s23, 1
      %s430 = scalar_select %p429, %s23, 1
      %p431 = scmp.lt.s32.totalorder %s25, 0
      %s432 = scalar_select %p431, %s25, 0
      %p433 = scmp.lt.s32.totalorder %s24, 0
      %s434 = scalar_select %p433, %s24, 0
      %s435 = sadd.s32 %s434, %s432
      %s436 = smul.addr %s430, 4
      %s437 = sadd.s32 %s435, %s436
      %s438 = smul.addr %s437, 4
      %s439 = scalar_lea.vmem %s2, %s438
      %p440 = scmp.lt.s32.totalorder %s23, 1
      %s441 = scalar_select %p440, %s23, 1
      %p442 = scmp.lt.s32.totalorder %s25, 0
      %s443 = scalar_select %p442, %s25, 0
      %p444 = scmp.lt.s32.totalorder %s24, 0
      %s445 = scalar_select %p444, %s24, 0
      %s446 = sadd.s32 %s445, %s443
      %s447 = smul.addr %s441, 4
      %s448 = sadd.s32 %s446, %s447
      %s449 = smul.addr %s448, 4
      %s450 = scalar_lea.vmem %s3, %s449
      %p451 = scmp.lt.s32.totalorder %s23, 1
      %s452 = scalar_select %p451, %s23, 1
      %p453 = scmp.lt.s32.totalorder %s25, 0
      %s454 = scalar_select %p453, %s25, 0
      %p455 = scmp.lt.s32.totalorder %s24, 0
      %s456 = scalar_select %p455, %s24, 0
      %s457 = sadd.s32 %s456, %s454
      %s458 = smul.addr %s452, 4
      %s459 = sadd.s32 %s457, %s458
      %s460 = smul.addr %s459, 4
      %s461 = scalar_lea.vmem %s4, %s460
      %p462 = scmp.lt.s32.totalorder %s23, 1
      %s463 = scalar_select %p462, %s23, 1
      %p464 = scmp.lt.s32.totalorder %s25, 0
      %s465 = scalar_select %p464, %s25, 0
      %p466 = scmp.lt.s32.totalorder %s24, 0
      %s467 = scalar_select %p466, %s24, 0
      %s468 = sadd.s32 %s467, %s465
      %s469 = smul.addr %s463, 2
      %s470 = sadd.s32 %s468, %s469
      %s471 = smul.addr %s470, 4
      %s472 = scalar_lea.vmem %s5, %s471
      %p473 = scmp.lt.s32.totalorder %s23, 1
      %s474 = scalar_select %p473, %s23, 1
      %p475 = scmp.lt.s32.totalorder %s25, 0
      %s476 = scalar_select %p475, %s25, 0
      %p477 = scmp.lt.s32.totalorder %s24, 0
      %s478 = scalar_select %p477, %s24, 0
      %s479 = sadd.s32 %s478, %s476
      %s480 = smul.addr %s474, 2
      %s481 = sadd.s32 %s479, %s480
      %s482 = smul.addr %s481, 4
      %s483 = scalar_lea.vmem %s6, %s482
      %v484 = vld [vmem:[%s420] sm:$0x3]
      %v485 = vld [vmem:[%s428] sm:$0x3]
      %v486 = vld [vmem:[%s439] sm:$0xf]
      %v487 = vld [vmem:[%s450] sm:$0xf]
      %v488 = vld [vmem:[%s461] sm:$0xf]
      %v489 = vadd.f32 %v484, %v485
      %v492 = vunpack.c.l.s4 1966171168
      %v493 = vunpack.c.0.s8 %v492
      %v494 = vlaneseq
      %v495 = vshrl.u32 %v494, 7
      %v496 = vsub.s32 %v493, %v495
      %v497 = vrot.slane %v489, %v496
      %v498 = vcombine.high %v497, %v497
      %v500 = vunpack.c.l.s4 1966171168
      %v501 = vunpack.c.0.s8 %v500
      %v502 = vlaneseq
      %v503 = vshrl.u32 %v502, 7
      %v504 = vsub.s32 %v501, %v503
      %v505 = vrot.slane %v497, %v504
      %v507 = vunpack.c.l.s4 1966171168
      %v508 = vunpack.c.0.s8 %v507
      %v509 = vlaneseq
      %v510 = vshrl.u32 %v509, 7
      %v511 = vsub.s32 %v508, %v510
      %v512 = vrot.slane %v498, %v511
      %v513 = vlaneseq
      %v514 = vshrl.u32 %v513, 7
      %v515 = vsub.s32 0, %v514
      %v516 = vrot.slane %v505, %v515
      %v517 = vlaneseq
      %v518 = vshrl.u32 %v517, 7
      %v519 = vsub.s32 0, %v518
      %v520 = vrot.slane %v512, %v519
      %v523 = vmul.f32 %v516, %v486
      %v524 = vmul.f32 %v520, %v486
      %v527 = vunpack.c.l.s4 1966171168
      %v528 = vunpack.c.0.s8 %v527
      %v529 = vlaneseq
      %v530 = vshrl.u32 %v529, 7
      %v531 = vsub.s32 %v528, %v530
      %v532 = vrot.slane %v484, %v531
      %v533 = vcombine.high %v532, %v532
      %v535 = vunpack.c.l.s4 1966171168
      %v536 = vunpack.c.0.s8 %v535
      %v537 = vlaneseq
      %v538 = vshrl.u32 %v537, 7
      %v539 = vsub.s32 %v536, %v538
      %v540 = vrot.slane %v532, %v539
      %v542 = vunpack.c.l.s4 1966171168
      %v543 = vunpack.c.0.s8 %v542
      %v544 = vlaneseq
      %v545 = vshrl.u32 %v544, 7
      %v546 = vsub.s32 %v543, %v545
      %v547 = vrot.slane %v533, %v546
      %v548 = vlaneseq
      %v549 = vshrl.u32 %v548, 7
      %v550 = vsub.s32 0, %v549
      %v551 = vrot.slane %v540, %v550
      %v552 = vlaneseq
      %v553 = vshrl.u32 %v552, 7
      %v554 = vsub.s32 0, %v553
      %v555 = vrot.slane %v547, %v554
      %v558 = vmul.f32 %v551, %v487
      %v559 = vmul.f32 %v555, %v487
      %v562 = vunpack.c.l.s4 1966171168
      %v563 = vunpack.c.0.s8 %v562
      %v564 = vlaneseq
      %v565 = vshrl.u32 %v564, 7
      %v566 = vsub.s32 %v563, %v565
      %v567 = vrot.slane %v485, %v566
      %v568 = vcombine.high %v567, %v567
      %v570 = vunpack.c.l.s4 1966171168
      %v571 = vunpack.c.0.s8 %v570
      %v572 = vlaneseq
      %v573 = vshrl.u32 %v572, 7
      %v574 = vsub.s32 %v571, %v573
      %v575 = vrot.slane %v567, %v574
      %v577 = vunpack.c.l.s4 1966171168
      %v578 = vunpack.c.0.s8 %v577
      %v579 = vlaneseq
      %v580 = vshrl.u32 %v579, 7
      %v581 = vsub.s32 %v578, %v580
      %v582 = vrot.slane %v568, %v581
      %v583 = vlaneseq
      %v584 = vshrl.u32 %v583, 7
      %v585 = vsub.s32 0, %v584
      %v586 = vrot.slane %v575, %v585
      %v587 = vlaneseq
      %v588 = vshrl.u32 %v587, 7
      %v589 = vsub.s32 0, %v588
      %v590 = vrot.slane %v582, %v589
      %v593 = vmul.f32 %v586, %v488
      %v594 = vmul.f32 %v590, %v488
      %v595 = vsub.f32 %v523, %v593
      %v596 = vsub.f32 %v524, %v594
      %v597 = vadd.f32 %v595, 0.0
      %v598 = vadd.f32 %v596, 0.0
      %v599 = vadd.f32 %v523, %v558
      %v600 = vadd.f32 %v524, %v559
      %v601 = vadd.f32 %v599, 0.0
      %v602 = vadd.f32 %v600, 0.0
      %s603 = scalar_lea.vmem %s420, 2
      %v604 = vld [vmem:[%s603] sm:$0x3]
      %s605 = scalar_lea.vmem %s428, 2
      %v606 = vld [vmem:[%s605] sm:$0x3]
      %s607 = scalar_lea.vmem %s439, 4
      %v608 = vld [vmem:[%s607] sm:$0xf]
      %s609 = scalar_lea.vmem %s450, 4
      %v610 = vld [vmem:[%s609] sm:$0xf]
      %s611 = scalar_lea.vmem %s461, 4
      %v612 = vld [vmem:[%s611] sm:$0xf]
      %v613 = vadd.f32 %v604, %v606
      %v616 = vunpack.c.l.s4 1966171168
      %v617 = vunpack.c.0.s8 %v616
      %v618 = vlaneseq
      %v619 = vshrl.u32 %v618, 7
      %v620 = vsub.s32 %v617, %v619
      %v621 = vrot.slane %v613, %v620
      %v622 = vcombine.high %v621, %v621
      %v624 = vunpack.c.l.s4 1966171168
      %v625 = vunpack.c.0.s8 %v624
      %v626 = vlaneseq
      %v627 = vshrl.u32 %v626, 7
      %v628 = vsub.s32 %v625, %v627
      %v629 = vrot.slane %v621, %v628
      %v631 = vunpack.c.l.s4 1966171168
      %v632 = vunpack.c.0.s8 %v631
      %v633 = vlaneseq
      %v634 = vshrl.u32 %v633, 7
      %v635 = vsub.s32 %v632, %v634
      %v636 = vrot.slane %v622, %v635
      %v637 = vlaneseq
      %v638 = vshrl.u32 %v637, 7
      %v639 = vsub.s32 0, %v638
      %v640 = vrot.slane %v629, %v639
      %v641 = vlaneseq
      %v642 = vshrl.u32 %v641, 7
      %v643 = vsub.s32 0, %v642
      %v644 = vrot.slane %v636, %v643
      %v647 = vmul.f32 %v640, %v608
      %v648 = vmul.f32 %v644, %v608
      %v651 = vunpack.c.l.s4 1966171168
      %v652 = vunpack.c.0.s8 %v651
      %v653 = vlaneseq
      %v654 = vshrl.u32 %v653, 7
      %v655 = vsub.s32 %v652, %v654
      %v656 = vrot.slane %v604, %v655
      %v657 = vcombine.high %v656, %v656
      %v659 = vunpack.c.l.s4 1966171168
      %v660 = vunpack.c.0.s8 %v659
      %v661 = vlaneseq
      %v662 = vshrl.u32 %v661, 7
      %v663 = vsub.s32 %v660, %v662
      %v664 = vrot.slane %v656, %v663
      %v666 = vunpack.c.l.s4 1966171168
      %v667 = vunpack.c.0.s8 %v666
      %v668 = vlaneseq
      %v669 = vshrl.u32 %v668, 7
      %v670 = vsub.s32 %v667, %v669
      %v671 = vrot.slane %v657, %v670
      %v672 = vlaneseq
      %v673 = vshrl.u32 %v672, 7
      %v674 = vsub.s32 0, %v673
      %v675 = vrot.slane %v664, %v674
      %v676 = vlaneseq
      %v677 = vshrl.u32 %v676, 7
      %v678 = vsub.s32 0, %v677
      %v679 = vrot.slane %v671, %v678
      %v682 = vmul.f32 %v675, %v610
      %v683 = vmul.f32 %v679, %v610
      %v686 = vunpack.c.l.s4 1966171168
      %v687 = vunpack.c.0.s8 %v686
      %v688 = vlaneseq
      %v689 = vshrl.u32 %v688, 7
      %v690 = vsub.s32 %v687, %v689
      %v691 = vrot.slane %v606, %v690
      %v692 = vcombine.high %v691, %v691
      %v694 = vunpack.c.l.s4 1966171168
      %v695 = vunpack.c.0.s8 %v694
      %v696 = vlaneseq
      %v697 = vshrl.u32 %v696, 7
      %v698 = vsub.s32 %v695, %v697
      %v699 = vrot.slane %v691, %v698
      %v701 = vunpack.c.l.s4 1966171168
      %v702 = vunpack.c.0.s8 %v701
      %v703 = vlaneseq
      %v704 = vshrl.u32 %v703, 7
      %v705 = vsub.s32 %v702, %v704
      %v706 = vrot.slane %v692, %v705
      %v707 = vlaneseq
      %v708 = vshrl.u32 %v707, 7
      %v709 = vsub.s32 0, %v708
      %v710 = vrot.slane %v699, %v709
      %v711 = vlaneseq
      %v712 = vshrl.u32 %v711, 7
      %v713 = vsub.s32 0, %v712
      %v714 = vrot.slane %v706, %v713
      %v717 = vmul.f32 %v710, %v612
      %v718 = vmul.f32 %v714, %v612
      %v719 = vsub.f32 %v647, %v717
      %v720 = vsub.f32 %v648, %v718
      %v721 = vadd.f32 %v597, %v719
      %v722 = vadd.f32 %v598, %v720
      %v723 = vadd.f32 %v647, %v682
      %v724 = vadd.f32 %v648, %v683
      %v725 = vadd.f32 %v601, %v723
      %v726 = vadd.f32 %v602, %v724
      %s727 = scalar_lea.vmem %s420, 4
      %v728 = vld [vmem:[%s727] sm:$0x3]
      %s729 = scalar_lea.vmem %s428, 4
      %v730 = vld [vmem:[%s729] sm:$0x3]
      %s731 = scalar_lea.vmem %s439, 8
      %v732 = vld [vmem:[%s731] sm:$0xf]
      %s733 = scalar_lea.vmem %s450, 8
      %v734 = vld [vmem:[%s733] sm:$0xf]
      %s735 = scalar_lea.vmem %s461, 8
      %v736 = vld [vmem:[%s735] sm:$0xf]
      %v737 = vadd.f32 %v728, %v730
      %v740 = vunpack.c.l.s4 1966171168
      %v741 = vunpack.c.0.s8 %v740
      %v742 = vlaneseq
      %v743 = vshrl.u32 %v742, 7
      %v744 = vsub.s32 %v741, %v743
      %v745 = vrot.slane %v737, %v744
      %v746 = vcombine.high %v745, %v745
      %v748 = vunpack.c.l.s4 1966171168
      %v749 = vunpack.c.0.s8 %v748
      %v750 = vlaneseq
      %v751 = vshrl.u32 %v750, 7
      %v752 = vsub.s32 %v749, %v751
      %v753 = vrot.slane %v745, %v752
      %v755 = vunpack.c.l.s4 1966171168
      %v756 = vunpack.c.0.s8 %v755
      %v757 = vlaneseq
      %v758 = vshrl.u32 %v757, 7
      %v759 = vsub.s32 %v756, %v758
      %v760 = vrot.slane %v746, %v759
      %v761 = vlaneseq
      %v762 = vshrl.u32 %v761, 7
      %v763 = vsub.s32 0, %v762
      %v764 = vrot.slane %v753, %v763
      %v765 = vlaneseq
      %v766 = vshrl.u32 %v765, 7
      %v767 = vsub.s32 0, %v766
      %v768 = vrot.slane %v760, %v767
      %v771 = vmul.f32 %v764, %v732
      %v772 = vmul.f32 %v768, %v732
      %v775 = vunpack.c.l.s4 1966171168
      %v776 = vunpack.c.0.s8 %v775
      %v777 = vlaneseq
      %v778 = vshrl.u32 %v777, 7
      %v779 = vsub.s32 %v776, %v778
      %v780 = vrot.slane %v728, %v779
      %v781 = vcombine.high %v780, %v780
      %v783 = vunpack.c.l.s4 1966171168
      %v784 = vunpack.c.0.s8 %v783
      %v785 = vlaneseq
      %v786 = vshrl.u32 %v785, 7
      %v787 = vsub.s32 %v784, %v786
      %v788 = vrot.slane %v780, %v787
      %v790 = vunpack.c.l.s4 1966171168
      %v791 = vunpack.c.0.s8 %v790
      %v792 = vlaneseq
      %v793 = vshrl.u32 %v792, 7
      %v794 = vsub.s32 %v791, %v793
      %v795 = vrot.slane %v781, %v794
      %v796 = vlaneseq
      %v797 = vshrl.u32 %v796, 7
      %v798 = vsub.s32 0, %v797
      %v799 = vrot.slane %v788, %v798
      %v800 = vlaneseq
      %v801 = vshrl.u32 %v800, 7
      %v802 = vsub.s32 0, %v801
      %v803 = vrot.slane %v795, %v802
      %v806 = vmul.f32 %v799, %v734
      %v807 = vmul.f32 %v803, %v734
      %v810 = vunpack.c.l.s4 1966171168
      %v811 = vunpack.c.0.s8 %v810
      %v812 = vlaneseq
      %v813 = vshrl.u32 %v812, 7
      %v814 = vsub.s32 %v811, %v813
      %v815 = vrot.slane %v730, %v814
      %v816 = vcombine.high %v815, %v815
      %v818 = vunpack.c.l.s4 1966171168
      %v819 = vunpack.c.0.s8 %v818
      %v820 = vlaneseq
      %v821 = vshrl.u32 %v820, 7
      %v822 = vsub.s32 %v819, %v821
      %v823 = vrot.slane %v815, %v822
      %v825 = vunpack.c.l.s4 1966171168
      %v826 = vunpack.c.0.s8 %v825
      %v827 = vlaneseq
      %v828 = vshrl.u32 %v827, 7
      %v829 = vsub.s32 %v826, %v828
      %v830 = vrot.slane %v816, %v829
      %v831 = vlaneseq
      %v832 = vshrl.u32 %v831, 7
      %v833 = vsub.s32 0, %v832
      %v834 = vrot.slane %v823, %v833
      %v835 = vlaneseq
      %v836 = vshrl.u32 %v835, 7
      %v837 = vsub.s32 0, %v836
      %v838 = vrot.slane %v830, %v837
      %v841 = vmul.f32 %v834, %v736
      %v842 = vmul.f32 %v838, %v736
      %v843 = vsub.f32 %v771, %v841
      %v844 = vsub.f32 %v772, %v842
      %v845 = vadd.f32 %v721, %v843
      %v846 = vadd.f32 %v722, %v844
      %v847 = vadd.f32 %v771, %v806
      %v848 = vadd.f32 %v772, %v807
      %v849 = vadd.f32 %v725, %v847
      %v850 = vadd.f32 %v726, %v848
      %s851 = scalar_lea.vmem %s420, 6
      %v852 = vld [vmem:[%s851] sm:$0x3]
      %s853 = scalar_lea.vmem %s428, 6
      %v854 = vld [vmem:[%s853] sm:$0x3]
      %s855 = scalar_lea.vmem %s439, 12
      %v856 = vld [vmem:[%s855] sm:$0xf]
      %s857 = scalar_lea.vmem %s450, 12
      %v858 = vld [vmem:[%s857] sm:$0xf]
      %s859 = scalar_lea.vmem %s461, 12
      %v860 = vld [vmem:[%s859] sm:$0xf]
      %v861 = vadd.f32 %v852, %v854
      %v864 = vunpack.c.l.s4 1966171168
      %v865 = vunpack.c.0.s8 %v864
      %v866 = vlaneseq
      %v867 = vshrl.u32 %v866, 7
      %v868 = vsub.s32 %v865, %v867
      %v869 = vrot.slane %v861, %v868
      %v870 = vcombine.high %v869, %v869
      %v872 = vunpack.c.l.s4 1966171168
      %v873 = vunpack.c.0.s8 %v872
      %v874 = vlaneseq
      %v875 = vshrl.u32 %v874, 7
      %v876 = vsub.s32 %v873, %v875
      %v877 = vrot.slane %v869, %v876
      %v879 = vunpack.c.l.s4 1966171168
      %v880 = vunpack.c.0.s8 %v879
      %v881 = vlaneseq
      %v882 = vshrl.u32 %v881, 7
      %v883 = vsub.s32 %v880, %v882
      %v884 = vrot.slane %v870, %v883
      %v885 = vlaneseq
      %v886 = vshrl.u32 %v885, 7
      %v887 = vsub.s32 0, %v886
      %v888 = vrot.slane %v877, %v887
      %v889 = vlaneseq
      %v890 = vshrl.u32 %v889, 7
      %v891 = vsub.s32 0, %v890
      %v892 = vrot.slane %v884, %v891
      %v895 = vmul.f32 %v888, %v856
      %v896 = vmul.f32 %v892, %v856
      %v899 = vunpack.c.l.s4 1966171168
      %v900 = vunpack.c.0.s8 %v899
      %v901 = vlaneseq
      %v902 = vshrl.u32 %v901, 7
      %v903 = vsub.s32 %v900, %v902
      %v904 = vrot.slane %v852, %v903
      %v905 = vcombine.high %v904, %v904
      %v907 = vunpack.c.l.s4 1966171168
      %v908 = vunpack.c.0.s8 %v907
      %v909 = vlaneseq
      %v910 = vshrl.u32 %v909, 7
      %v911 = vsub.s32 %v908, %v910
      %v912 = vrot.slane %v904, %v911
      %v914 = vunpack.c.l.s4 1966171168
      %v915 = vunpack.c.0.s8 %v914
      %v916 = vlaneseq
      %v917 = vshrl.u32 %v916, 7
      %v918 = vsub.s32 %v915, %v917
      %v919 = vrot.slane %v905, %v918
      %v920 = vlaneseq
      %v921 = vshrl.u32 %v920, 7
      %v922 = vsub.s32 0, %v921
      %v923 = vrot.slane %v912, %v922
      %v924 = vlaneseq
      %v925 = vshrl.u32 %v924, 7
      %v926 = vsub.s32 0, %v925
      %v927 = vrot.slane %v919, %v926
      %v930 = vmul.f32 %v923, %v858
      %v931 = vmul.f32 %v927, %v858
      %v934 = vunpack.c.l.s4 1966171168
      %v935 = vunpack.c.0.s8 %v934
      %v936 = vlaneseq
      %v937 = vshrl.u32 %v936, 7
      %v938 = vsub.s32 %v935, %v937
      %v939 = vrot.slane %v854, %v938
      %v940 = vcombine.high %v939, %v939
      %v942 = vunpack.c.l.s4 1966171168
      %v943 = vunpack.c.0.s8 %v942
      %v944 = vlaneseq
      %v945 = vshrl.u32 %v944, 7
      %v946 = vsub.s32 %v943, %v945
      %v947 = vrot.slane %v939, %v946
      %v949 = vunpack.c.l.s4 1966171168
      %v950 = vunpack.c.0.s8 %v949
      %v951 = vlaneseq
      %v952 = vshrl.u32 %v951, 7
      %v953 = vsub.s32 %v950, %v952
      %v954 = vrot.slane %v940, %v953
      %v955 = vlaneseq
      %v956 = vshrl.u32 %v955, 7
      %v957 = vsub.s32 0, %v956
      %v958 = vrot.slane %v947, %v957
      %v959 = vlaneseq
      %v960 = vshrl.u32 %v959, 7
      %v961 = vsub.s32 0, %v960
      %v962 = vrot.slane %v954, %v961
      %v965 = vmul.f32 %v958, %v860
      %v966 = vmul.f32 %v962, %v860
      %v967 = vsub.f32 %v895, %v965
      %v968 = vsub.f32 %v896, %v966
      %v969 = vadd.f32 %v845, %v967
      %v970 = vadd.f32 %v846, %v968
      %v971 = vadd.f32 %v895, %v930
      %v972 = vadd.f32 %v896, %v931
      %v973 = vadd.f32 %v849, %v971
      %v974 = vadd.f32 %v850, %v972
      %975 = vst [vmem:[%s472] sm:$0xf] %v969
      %976 = vst [vmem:[%s472 + $0x4] sm:$0xf] %v970
      %977 = vst [vmem:[%s483] sm:$0xf] %v973
      %978 = vst [vmem:[%s483 + $0x4] sm:$0xf] %v974
      %p979 = scmp.lt.s32.totalorder %s23, 1
      %s980 = scalar_select %p979, %s23, 1
      %p981 = scmp.lt.s32.totalorder %s25, 0
      %s982 = scalar_select %p981, %s25, 0
      %p983 = scmp.lt.s32.totalorder %s24, 0
      %s984 = scalar_select %p983, %s24, 0
      %s985 = sadd.s32 %s984, %s982
      %s986 = smul.addr %s980, 2
      %s987 = sadd.s32 %s985, %s986
      %s988 = smul.addr %s987, 4
      %s989 = scalar_lea.vmem %s5, %s988
      %p990 = scmp.lt.s32.totalorder %s23, 1
      %s991 = scalar_select %p990, %s23, 1
      %p992 = scmp.lt.s32.totalorder %s25, 0
      %s993 = scalar_select %p992, %s25, 0
      %p994 = scmp.lt.s32.totalorder %s24, 0
      %s995 = scalar_select %p994, %s24, 0
      %s996 = sadd.s32 %s995, %s993
      %s997 = smul.addr %s991, 2
      %s998 = sadd.s32 %s996, %s997
      %s999 = smul.addr %s998, 4
      %s1000 = scalar_lea.vmem %s6, %s999
      // Predicated region
      $region41: #{spectral_conv2d.1} parent=39 // pred_check
        %p1001 = pneg %p205
      $region42: #{spectral_conv2d.1} parent=39 // pred_check_branch
        %1003 = sbr.rel (%p1001) target = $region44
      $region43: #{spectral_conv2d.1} parent=39 // pred_region
        _
      $region44: #{spectral_conv2d.1} parent=39 // pred_fallthru
        _
      // Predicated region
      $region45: #{spectral_conv2d.1} parent=39 // pred_check
        %p1004 = pneg %p235
      $region46: #{spectral_conv2d.1} parent=39 // pred_check_branch
        %1006 = sbr.rel (%p1004) target = $region48
      $region47: #{spectral_conv2d.1} parent=39 // pred_region
        _
      $region48: #{spectral_conv2d.1} parent=39 // pred_fallthru
        _
    $region40: #{spectral_conv2d.1} parent=5 // pred_fallthru
      _
    %p1007 = scmp.le.s32.totalorder 2, %s13
    // Predicated region
    $region49: #{spectral_conv2d.1} parent=5 // pred_check
      %p1008 = pneg %p1007
    $region50: #{spectral_conv2d.1} parent=5 // pred_check_branch
      %1010 = sbr.rel (%p1008) target = $region52
    $region51: #{spectral_conv2d.1} parent=5 // pred_region
      %s1011 = ssub.s32 %s13, 2
      // Predicated region
      $region53: #{spectral_conv2d.1} parent=51 // pred_check
        %p1012 = pneg %p211
      $region54: #{spectral_conv2d.1} parent=51 // pred_check_branch
        %1014 = sbr.rel (%p1012) target = $region56
      $region55: #{spectral_conv2d.1} parent=51 // pred_region
        %p1015 = scmp.lt.s32.totalorder %s26, 1
        %s1016 = scalar_select %p1015, %s26, 1
        %p1017 = scmp.lt.s32.totalorder %s28, 0
        %s1018 = scalar_select %p1017, %s28, 0
        %p1019 = scmp.lt.s32.totalorder %s27, 0
        %s1020 = scalar_select %p1019, %s27, 0
        %s1021 = sadd.s32 %s1020, %s1018
        %s1022 = smul.addr %s1016, 2
        %s1023 = sadd.s32 %s1021, %s1022
        %s1024 = smul.addr %s1023, 4
        %s1025 = scalar_lea.vmem %s5, %s1024
      $region56: #{spectral_conv2d.1} parent=51 // pred_fallthru
        _
      // Predicated region
      $region57: #{spectral_conv2d.1} parent=51 // pred_check
        %p1026 = pneg %p241
      $region58: #{spectral_conv2d.1} parent=51 // pred_check_branch
        %1028 = sbr.rel (%p1026) target = $region60
      $region59: #{spectral_conv2d.1} parent=51 // pred_region
        %p1029 = scmp.lt.s32.totalorder %s26, 1
        %s1030 = scalar_select %p1029, %s26, 1
        %p1031 = scmp.lt.s32.totalorder %s28, 0
        %s1032 = scalar_select %p1031, %s28, 0
        %p1033 = scmp.lt.s32.totalorder %s27, 0
        %s1034 = scalar_select %p1033, %s27, 0
        %s1035 = sadd.s32 %s1034, %s1032
        %s1036 = smul.addr %s1030, 2
        %s1037 = sadd.s32 %s1035, %s1036
        %s1038 = smul.addr %s1037, 4
        %s1039 = scalar_lea.vmem %s6, %s1038
      $region60: #{spectral_conv2d.1} parent=51 // pred_fallthru
        _
    $region52: #{spectral_conv2d.1} parent=5 // pred_fallthru
      _
  $region6: #{spectral_conv2d.1} parent=0 // loop_footer
    %s17 = sadd.s32 1, %s13
  $region7: #{spectral_conv2d.1} parent=0 // loop_footer_branch
    %12 = sbr.rel target = $region3
  $region8: #{spectral_conv2d.1} parent=0 // loop_exit
    _

// kernel: reverse.1
$region0: #{reverse.1}
  %s0 = inlined_call_operand.vmem [shape: f32[2,4,16,7], index: 0, kind: input, shape index: {}]
  %s1 = inlined_call_operand.vmem [shape: f32[2,4,16,7], index: 1, kind: output, shape index: {}]
  $region1: #{reverse.1} parent=0
    #allocation0 [shape = 'u8[65536]{0}', space=vmem, size = 0x10000, scoped, tag = 'operand span for operand 0']
    #allocation1 [shape = 'u8[32768]{0}', space=vmem, size = 0x8000, scoped, tag = 'operand span for operand 1']
    %s2 = scalar_lea.vmem [#allocation0], 8
    // Predicated region
    $region2: #{reverse.1} parent=1 // pred_check
      _
    $region3: #{reverse.1} parent=1 // pred_check_branch
      %4 = sbr.rel (0) target = $region5
    $region4: #{reverse.1} parent=1 // pred_region
      // Predicated region
      $region6: #{reverse.1} parent=4 // pred_check
        _
      $region7: #{reverse.1} parent=4 // pred_check_branch
        %6 = sbr.rel (0) target = $region9
      $region8: #{reverse.1} parent=4 // pred_region
        // Predicated region
        $region21: #{reverse.1} parent=8 // pred_check
          _
        $region22: #{reverse.1} parent=8 // pred_check_branch
          %36 = sbr.rel (0) target = $region24
        $region23: #{reverse.1} parent=8 // pred_region
          loop: start=0, step=1, limit=1
          $region25: #{reverse.1} parent=23 // loop_pre_header
            _
          $region26: #{reverse.1} parent=23 // loop_header
            %s38 = sphi 0, %s42
            %p39 = scmp.ge.s32.totalorder %s38, 1
            %s43 = sphi %s0, %s0
            %s44 = sphi %s2, %s2
          $region27: #{reverse.1} parent=23 // loop_header_branch
            %41 = sbr.rel (%p39) target = $region31
          $region28: #{reverse.1} parent=23 // loop_body
            %v45 = vld [vmem:[%s43] sm:$0xff]
            %46 = vst [vmem:[%s44] sm:$0xff] %v45
            %v47 = vld [vmem:[%s43 + $0x8] sm:$0xff]
            %48 = vst [vmem:[%s44 + $0x10] sm:$0xff] %v47
            %v49 = vld [vmem:[%s43 + $0x10] sm:$0xff]
            %50 = vst [vmem:[%s44 + $0x20] sm:$0xff] %v49
            %v51 = vld [vmem:[%s43 + $0x18] sm:$0xff]
            %52 = vst [vmem:[%s44 + $0x30] sm:$0xff] %v51
            %v53 = vld [vmem:[%s43 + $0x20] sm:$0xff]
            %54 = vst [vmem:[%s44 + $0x40] sm:$0xff] %v53
            %v55 = vld [vmem:[%s43 + $0x28] sm:$0xff]
            %56 = vst [vmem:[%s44 + $0x50] sm:$0xff] %v55
            %v57 = vld [vmem:[%s43 + $0x30] sm:$0xff]
            %58 = vst [vmem:[%s44 + $0x60] sm:$0xff] %v57
            %v59 = vld [vmem:[%s43 + $0x38] sm:$0xff]
            %60 = vst [vmem:[%s44 + $0x70] sm:$0xff] %v59
          $region29: #{reverse.1} parent=23 // loop_footer
            %s42 = sadd.s32 1, %s38
          $region30: #{reverse.1} parent=23 // loop_footer_branch
            %37 = sbr.rel target = $region26
          $region31: #{reverse.1} parent=23 // loop_exit
            _
        $region24: #{reverse.1} parent=8 // pred_fallthru
          _
        // Predicated region
        $region32: #{reverse.1} parent=8 // pred_check
          _
        $region33: #{reverse.1} parent=8 // pred_check_branch
          %62 = sbr.rel target = $region35
        $region34: #{reverse.1} parent=8 // pred_region
          _
        $region35: #{reverse.1} parent=8 // pred_fallthru
          _
      $region9: #{reverse.1} parent=4 // pred_fallthru
        _
      // Predicated region
      $region10: #{reverse.1} parent=4 // pred_check
        _
      $region11: #{reverse.1} parent=4 // pred_check_branch
        %8 = sbr.rel target = $region13
      $region12: #{reverse.1} parent=4 // pred_region
        %s10 = ssub.s32 256, 1
        loop: start=0, step=1, limit=1
        $region14: #{reverse.1} parent=12 // loop_pre_header
          _
        $region15: #{reverse.1} parent=12 // loop_header
          %s12 = sphi 0, %s16
          %p13 = scmp.ge.s32.totalorder %s12, 1
          %s17 = sphi %s0, %s0
          %s18 = sphi %s2, %s2
        $region16: #{reverse.1} parent=12 // loop_header_branch
          %15 = sbr.rel (%p13) target = $region20
        $region17: #{reverse.1} parent=12 // loop_body
          %v19 = vld [vmem:[%s17] sm:%s10]
          %20 = vst [vmem:[%s18] sm:%s10] %v19
          %v21 = vld [vmem:[%s17 + $0x8] sm:%s10]
          %22 = vst [vmem:[%s18 + $0x10] sm:%s10] %v21
          %v23 = vld [vmem:[%s17 + $0x10] sm:%s10]
          %24 = vst [vmem:[%s18 + $0x20] sm:%s10] %v23
          %v25 = vld [vmem:[%s17 + $0x18] sm:%s10]
          %26 = vst [vmem:[%s18 + $0x30] sm:%s10] %v25
          %v27 = vld [vmem:[%s17 + $0x20] sm:%s10]
          %28 = vst [vmem:[%s18 + $0x40] sm:%s10] %v27
          %v29 = vld [vmem:[%s17 + $0x28] sm:%s10]
          %30 = vst [vmem:[%s18 + $0x50] sm:%s10] %v29
          %v31 = vld [vmem:[%s17 + $0x30] sm:%s10]
          %32 = vst [vmem:[%s18 + $0x60] sm:%s10] %v31
          %v33 = vld [vmem:[%s17 + $0x38] sm:%s10]
          %34 = vst [vmem:[%s18 + $0x70] sm:%s10] %v33
        $region18: #{reverse.1} parent=12 // loop_footer
          %s16 = sadd.s32 1, %s12
        $region19: #{reverse.1} parent=12 // loop_footer_branch
          %11 = sbr.rel target = $region15
        $region20: #{reverse.1} parent=12 // loop_exit
          _
      $region13: #{reverse.1} parent=4 // pred_fallthru
        _
    $region5: #{reverse.1} parent=1 // pred_fallthru
      _
    %63 = vnop
    %s64 = scalar_lea.vmem [#allocation0], 7
    %v65 = vld [vmem:[%s64] ss:$-1 sm:$0xff]
    %v66 = vrot.slane %v65, 1
    %67 = vst [vmem:[#allocation1] sm:$0xff] %v66
    %s68 = scalar_lea.vmem [#allocation0], 8
    %s69 = scalar_lea.vmem %s68, 7 [#allocation0]
    %v70 = vld [vmem:[%s69] ss:$-1 sm:$0xff]
    %v71 = vrot.slane %v70, 1
    %v72 = vlaneseq
    %v73 = vshrl.u32 %v72, 7
    %vm74 = vcmp.lt.s32.totalorder %v73, 7
    %75 = vst.msk [vmem:[#allocation1] sm:$0xff] %vm74, %v71
    %s76 = scalar_lea.vmem [#allocation1], 8
    %s77 = scalar_lea.vmem [#allocation0], 16
    %s78 = scalar_lea.vmem %s77, 7 [#allocation0]
    %v79 = vld [vmem:[%s78] ss:$-1 sm:$0xff]
    %v80 = vrot.slane %v79, 1
    %81 = vst [vmem:[%s76] sm:$0xff] %v80
    %s82 = scalar_lea.vmem %s77, 8 [#allocation0]
    %s83 = scalar_lea.vmem %s82, 7 [#allocation0]
    %v84 = vld [vmem:[%s83] ss:$-1 sm:$0xff]
    %v85 = vrot.slane %v84, 1
    %v86 = vlaneseq
    %v87 = vshrl.u32 %v86, 7
    %vm88 = vcmp.lt.s32.totalorder %v87, 7
    %89 = vst.msk [vmem:[%s76] sm:$0xff] %vm88, %v85
    %s90 = scalar_lea.vmem [#allocation1], 16
    %s91 = scalar_lea.vmem [#allocation0], 32
    %s92 = scalar_lea.vmem %s91, 7 [#allocation0]
    %v93 = vld [vmem:[%s92] ss:$-1 sm:$0xff]
    %v94 = vrot.slane %v93, 1
    %95 = vst [vmem:[%s90] sm:$0xff] %v94
    %s96 = scalar_lea.vmem %s91, 8 [#allocation0]
    %s97 = scalar_lea.vmem %s96, 7 [#allocation0]
    %v98 = vld [vmem:[%s97] ss:$-1 sm:$0xff]
    %v99 = vrot.slane %v98, 1
    %v100 = vlaneseq
    %v101 = vshrl.u32 %v100, 7
    %vm102 = vcmp.lt.s32.totalorder %v101, 7
    %103 = vst.msk [vmem:[%s90] sm:$0xff] %vm102, %v99
    %s104 = scalar_lea.vmem [#allocation1], 24
    %s105 = scalar_lea.vmem [#allocation0], 48
    %s106 = scalar_lea.vmem %s105, 7 [#allocation0]
    %v107 = vld [vmem:[%s106] ss:$-1 sm:$0xff]
    %v108 = vrot.slane %v107, 1
    %109 = vst [vmem:[%s104] sm:$0xff] %v108
    %s110 = scalar_lea.vmem %s105, 8 [#allocation0]
    %s111 = scalar_lea.vmem %s110, 7 [#allocation0]
    %v112 = vld [vmem:[%s111] ss:$-1 sm:$0xff]
    %v113 = vrot.slane %v112, 1
    %v114 = vlaneseq
    %v115 = vshrl.u32 %v114, 7
    %vm116 = vcmp.lt.s32.totalorder %v115, 7
    %117 = vst.msk [vmem:[%s104] sm:$0xff] %vm116, %v113
    %s118 = scalar_lea.vmem [#allocation1], 32
    %s119 = scalar_lea.vmem [#allocation0], 64
    %s120 = scalar_lea.vmem %s119, 7 [#allocation0]
    %v121 = vld [vmem:[%s120] ss:$-1 sm:$0xff]
    %v122 = vrot.slane %v121, 1
    %123 = vst [vmem:[%s118] sm:$0xff] %v122
    %s124 = scalar_lea.vmem %s119, 8 [#allocation0]
    %s125 = scalar_lea.vmem %s124, 7 [#allocation0]
    %v126 = vld [vmem:[%s125] ss:$-1 sm:$0xff]
    %v127 = vrot.slane %v126, 1
    %v128 = vlaneseq
    %v129 = vshrl.u32 %v128, 7
    %vm130 = vcmp.lt.s32.totalorder %v129, 7
    %131 = vst.msk [vmem:[%s118] sm:$0xff] %vm130, %v127
    %s132 = scalar_lea.vmem [#allocation1], 40
    %s133 = scalar_lea.vmem [#allocation0], 80
    %s134 = scalar_lea.vmem %s133, 7 [#allocation0]
    %v135 = vld [vmem:[%s134] ss:$-1 sm:$0xff]
    %v136 = vrot.slane %v135, 1
    %137 = vst [vmem:[%s132] sm:$0xff] %v136
    %s138 = scalar_lea.vmem %s133, 8 [#allocation0]
    %s139 = scalar_lea.vmem %s138, 7 [#allocation0]
    %v140 = vld [vmem:[%s139] ss:$-1 sm:$0xff]
    %v141 = vrot.slane %v140, 1
    %v142 = vlaneseq
    %v143 = vshrl.u32 %v142, 7
    %vm144 = vcmp.lt.s32.totalorder %v143, 7
    %145 = vst.msk [vmem:[%s132] sm:$0xff] %vm144, %v141
    %s146 = scalar_lea.vmem [#allocation1], 48
    %s147 = scalar_lea.vmem [#allocation0], 96
    %s148 = scalar_lea.vmem %s147, 7 [#allocation0]
    %v149 = vld [vmem:[%s148] ss:$-1 sm:$0xff]
    %v150 = vrot.slane %v149, 1
    %151 = vst [vmem:[%s146] sm:$0xff] %v150
    %s152 = scalar_lea.vmem %s147, 8 [#allocation0]
    %s153 = scalar_lea.vmem %s152, 7 [#allocation0]
    %v154 = vld [vmem:[%s153] ss:$-1 sm:$0xff]
    %v155 = vrot.slane %v154, 1
    %v156 = vlaneseq
    %v157 = vshrl.u32 %v156, 7
    %vm158 = vcmp.lt.s32.totalorder %v157, 7
    %159 = vst.msk [vmem:[%s146] sm:$0xff] %vm158, %v155
    %s160 = scalar_lea.vmem [#allocation1], 56
    %s161 = scalar_lea.vmem [#allocation0], 112
    %s162 = scalar_lea.vmem %s161, 7 [#allocation0]
    %v163 = vld [vmem:[%s162] ss:$-1 sm:$0xff]
    %v164 = vrot.slane %v163, 1
    %165 = vst [vmem:[%s160] sm:$0xff] %v164
    %s166 = scalar_lea.vmem %s161, 8 [#allocation0]
    %s167 = scalar_lea.vmem %s166, 7 [#allocation0]
    %v168 = vld [vmem:[%s167] ss:$-1 sm:$0xff]
    %v169 = vrot.slane %v168, 1
    %v170 = vlaneseq
    %v171 = vshrl.u32 %v170, 7
    %vm172 = vcmp.lt.s32.totalorder %v171, 7
    %173 = vst.msk [vmem:[%s160] sm:$0xff] %vm172, %v169
    // Predicated region
    $region36: #{reverse.1} parent=1 // pred_check
      _
    $region37: #{reverse.1} parent=1 // pred_check_branch
      %175 = sbr.rel (0) target = $region39
    $region38: #{reverse.1} parent=1 // pred_region
      // Predicated region
      $region40: #{reverse.1} parent=38 // pred_check
        _
      $region41: #{reverse.1} parent=38 // pred_check_branch
        %177 = sbr.rel (0) target = $region43
      $region42: #{reverse.1} parent=38 // pred_region
        // Predicated region
        $region55: #{reverse.1} parent=42 // pred_check
          _
        $region56: #{reverse.1} parent=42 // pred_check_branch
          %207 = sbr.rel (0) target = $region58
        $region57: #{reverse.1} parent=42 // pred_region
          loop: start=0, step=1, limit=1
          $region59: #{reverse.1} parent=57 // loop_pre_header
            _
          $region60: #{reverse.1} parent=57 // loop_header
            %s209 = sphi 0, %s213
            %p210 = scmp.ge.s32.totalorder %s209, 1
            %s214 = sphi [#allocation1], [#allocation1]
            %s215 = sphi %s1, %s1
          $region61: #{reverse.1} parent=57 // loop_header_branch
            %212 = sbr.rel (%p210) target = $region65
          $region62: #{reverse.1} parent=57 // loop_body
            %v216 = vld [vmem:[%s214] sm:$0xff]
            %217 = vst [vmem:[%s215] sm:$0xff] %v216
            %v218 = vld [vmem:[%s214 + $0x8] sm:$0xff]
            %219 = vst [vmem:[%s215 + $0x8] sm:$0xff] %v218
            %v220 = vld [vmem:[%s214 + $0x10] sm:$0xff]
            %221 = vst [vmem:[%s215 + $0x10] sm:$0xff] %v220
            %v222 = vld [vmem:[%s214 + $0x18] sm:$0xff]
            %223 = vst [vmem:[%s215 + $0x18] sm:$0xff] %v222
            %v224 = vld [vmem:[%s214 + $0x20] sm:$0xff]
            %225 = vst [vmem:[%s215 + $0x20] sm:$0xff] %v224
            %v226 = vld [vmem:[%s214 + $0x28] sm:$0xff]
            %227 = vst [vmem:[%s215 + $0x28] sm:$0xff] %v226
            %v228 = vld [vmem:[%s214 + $0x30] sm:$0xff]
            %229 = vst [vmem:[%s215 + $0x30] sm:$0xff] %v228
            %v230 = vld [vmem:[%s214 + $0x38] sm:$0xff]
            %231 = vst [vmem:[%s215 + $0x38] sm:$0xff] %v230
          $region63: #{reverse.1} parent=57 // loop_footer
            %s213 = sadd.s32 1, %s209
          $region64: #{reverse.1} parent=57 // loop_footer_branch
            %208 = sbr.rel target = $region60
          $region65: #{reverse.1} parent=57 // loop_exit
            _
        $region58: #{reverse.1} parent=42 // pred_fallthru
          _
        // Predicated region
        $region66: #{reverse.1} parent=42 // pred_check
          _
        $region67: #{reverse.1} parent=42 // pred_check_branch
          %233 = sbr.rel target = $region69
        $region68: #{reverse.1} parent=42 // pred_region
          _
        $region69: #{reverse.1} parent=42 // pred_fallthru
          _
      $region43: #{reverse.1} parent=38 // pred_fallthru
        _
      // Predicated region
      $region44: #{reverse.1} parent=38 // pred_check
        _
      $region45: #{reverse.1} parent=38 // pred_check_branch
        %179 = sbr.rel target = $region47
      $region46: #{reverse.1} parent=38 // pred_region
        %s181 = ssub.s32 256, 1
        loop: start=0, step=1, limit=1
        $region48: #{reverse.1} parent=46 // loop_pre_header
          _
        $region49: #{reverse.1} parent=46 // loop_header
          %s183 = sphi 0, %s187
          %p184 = scmp.ge.s32.totalorder %s183, 1
          %s188 = sphi [#allocation1], [#allocation1]
          %s189 = sphi %s1, %s1
        $region50: #{reverse.1} parent=46 // loop_header_branch
          %186 = sbr.rel (%p184) target = $region54
        $region51: #{reverse.1} parent=46 // loop_body
          %v190 = vld [vmem:[%s188] sm:%s181]
          %191 = vst [vmem:[%s189] sm:%s181] %v190
          %v192 = vld [vmem:[%s188 + $0x8] sm:%s181]
          %193 = vst [vmem:[%s189 + $0x8] sm:%s181] %v192
          %v194 = vld [vmem:[%s188 + $0x10] sm:%s181]
          %195 = vst [vmem:[%s189 + $0x10] sm:%s181] %v194
          %v196 = vld [vmem:[%s188 + $0x18] sm:%s181]
          %197 = vst [vmem:[%s189 + $0x18] sm:%s181] %v196
          %v198 = vld [vmem:[%s188 + $0x20] sm:%s181]
          %199 = vst [vmem:[%s189 + $0x20] sm:%s181] %v198
          %v200 = vld [vmem:[%s188 + $0x28] sm:%s181]
          %201 = vst [vmem:[%s189 + $0x28] sm:%s181] %v200
          %v202 = vld [vmem:[%s188 + $0x30] sm:%s181]
          %203 = vst [vmem:[%s189 + $0x30] sm:%s181] %v202
          %v204 = vld [vmem:[%s188 + $0x38] sm:%s181]
          %205 = vst [vmem:[%s189 + $0x38] sm:%s181] %v204
        $region52: #{reverse.1} parent=46 // loop_footer
          %s187 = sadd.s32 1, %s183
        $region53: #{reverse.1} parent=46 // loop_footer_branch
          %182 = sbr.rel target = $region49
        $region54: #{reverse.1} parent=46 // loop_exit
          _
      $region47: #{reverse.1} parent=38 // pred_fallthru
        _
    $region39: #{reverse.1} parent=1 // pred_fallthru
      _
    %234 = vnop

</llo_original>
